<compile_context>
chip_gen: v6e
topology: v6e:2x2x1
jax: 0.10.0
libtpu: 0.0.40
codegen_flags: <defaults>
</compile_context>

<pallas_src>
import functools

import jax
import jax.numpy as jnp
import numpy as np
from jax.experimental import pallas as pl
from jax.experimental.pallas import tpu as pltpu

LEAKY_ALPHA = 0.2
MASK_BIAS = -1e30


def _tpu_generation():
    try:
        kind = jax.devices()[0].device_kind.lower()
    except Exception:
        return 0
    if "v7" in kind or "7x" in kind:
        return 7
    for g in (6, 5, 4, 3, 2):
        if f"v{g}" in kind:
            return g
    return 0


def _pick_tile(n, preferred, step=8):
    """Largest divisor of n that is a multiple of `step` and <= preferred (else n)."""
    if n <= preferred:
        return n
    start = preferred - preferred % step
    for t in range(start, step - 1, -step):
        if n % t == 0:
            return t
    return n


def _derive_dst_tile(n_pad, hd, h, preferred, vmem_budget):
    """Largest dst tile (multiple of 32) whose kernel-2 resident set fits VMEM."""
    def resident_bytes(tv):
        return (2 * tv * n_pad * 1        # int8 adjacency tile (double-buffered)
                + 2 * n_pad * hd * 2      # bf16 ft slab (TODO(synk): Buffered(1))
                + 2 * h * n_pad * 4       # a1 rows
                + 2 * tv * h * 4          # a2 tile
                + 2 * tv * hd * 4         # output tile
                + 4 * tv * n_pad * 4)     # f32 score/p temporaries (vregs+spill)
    tv = _pick_tile(n_pad, preferred, step=32)
    while tv > 32 and resident_bytes(tv) > vmem_budget:
        tv = _pick_tile(n_pad, tv - 32, step=32)
    return tv


# ---------------------------------------------------------------------------
# Kernel 1: ft = feat @ W (f32 MXU accumulation, bf16 output) plus the per-head
# attention dot products a1 = <ft, attn_l>, a2 = <ft, attn_r> in f32.
# ---------------------------------------------------------------------------
def proj_kernel(feat_ref, w_ref, al_ref, ar_ref, ft_ref, a1_ref, a2_ref,
                *, num_heads, out_dim):
    H, D = num_heads, out_dim
    ft = jnp.dot(feat_ref[...], w_ref[...],
                 preferred_element_type=jnp.float32)          # (TM, H*D) f32
    ft_ref[...] = ft.astype(jnp.bfloat16)                     # halve the HBM stream
    al = al_ref[...]                                          # (1, H*D)
    ar = ar_ref[...]
    a1_cols, a2_cols = [], []
    for h in range(H):                                        # H small and static
        sl = slice(h * D, (h + 1) * D)
        a1_cols.append(jnp.sum(ft[:, sl] * al[:, sl], axis=-1, keepdims=True))
        a2_cols.append(jnp.sum(ft[:, sl] * ar[:, sl], axis=-1, keepdims=True))
    a1_ref[...] = jnp.concatenate(a1_cols, axis=-1)           # (TM, H) f32
    a2_ref[...] = jnp.concatenate(a2_cols, axis=-1)           # (TM, H) f32


# ---------------------------------------------------------------------------
# Kernel 2: per-dst-tile edge attention + masked edge-softmax + aggregation.
# One grid step handles all H heads for TV destination nodes; every HBM block
# is lane-dense and the output is a single full-width (TV, H*D) store.
# ---------------------------------------------------------------------------
def gat_attn_kernel(mask_ref, ftsrc_ref, a1_ref, a2_ref, out_ref,
                    *, num_heads, out_dim, use_bf16_exp):
    H, D = num_heads, out_dim
    # Expand the int8 0/1 adjacency into an additive bias ONCE per dst tile
    # (shared by all H heads): 0.0 on edges, -1e30 on non-edges.
    bias = mask_ref[...].astype(jnp.float32) * (-MASK_BIAS) + MASK_BIAS  # (TV, N)
    a2_all = a2_ref[...]                                     # (TV, H) f32

    outs = []
    for h in range(H):
        sl = slice(h * D, (h + 1) * D)
        a1 = a1_ref[h:h + 1, :]                              # (1, N) f32, lane-dense
        a2 = a2_all[:, h:h + 1]                              # (TV, 1) f32
        s = a1 + a2                                          # (TV, N)
        s = jnp.maximum(s, LEAKY_ALPHA * s)                  # LeakyReLU(0.2)
        s = s + bias                                         # -1e30 on non-edges
        s = s - jnp.max(s, axis=-1, keepdims=True)
        # NOTE: a dst row with zero in-edges yields a uniform softmax here
        # (self-loops in the test graph guard this, matching the old kernel).
        if use_bf16_exp:                                     # v6e/v7x bf16 EUP
            p = jnp.exp(s.astype(jnp.bfloat16))              # (TV, N) bf16
            l = jnp.sum(p.astype(jnp.float32), axis=-1, keepdims=True)
            p_mx = p
        else:                                                # v5e: no bf16 EUP
            p = jnp.exp(s)
            l = jnp.sum(p, axis=-1, keepdims=True)
            p_mx = p.astype(jnp.bfloat16)
        inv = pl.reciprocal(l, approx=True)                  # (TV, 1) f32, EUP slot
        # Unnormalized aggregation on the MXU (bf16 x bf16 -> f32 accumulate),
        # then scale the small (TV, D) result instead of the (TV, N) matrix.
        acc = jnp.dot(p_mx, ftsrc_ref[:, sl],
                      preferred_element_type=jnp.float32)    # (TV, D)
        outs.append(acc * inv)
    out = jnp.concatenate(outs, axis=-1)                     # (TV, H*D)
    # agg_activation = ELU, one lane-dense full-width store per tile.
    out_ref[...] = jnp.where(out > 0.0, out, jnp.exp(out) - 1.0)


def gat_layer_forward(feat, adj, W, attn_l, attn_r, num_heads, out_dim,
                      *, row_tile=512, dst_tile=256):
    N, in_dim = feat.shape
    H, D = num_heads, out_dim
    HD = H * D
    assert W.shape == (in_dim, HD)
    assert adj.shape == (N, N)
    assert attn_l.shape == (H, D) and attn_r.shape == (H, D)

    gen = _tpu_generation()
    use_bf16_exp = gen >= 6                 # bf16 EUP exists on v6e/v7x only
    if gen >= 7:
        vmem_limit = 48 * 1024 * 1024       # v7x: 64 MiB physical, leave headroom
    elif gen in (5, 6):
        vmem_limit = 64 * 1024 * 1024       # 128 MiB physical parts
    else:
        vmem_limit = 32 * 1024 * 1024

    # Pad node count to a multiple of 32 so good tile divisors always exist and
    # the int8 mask blocks stay layout-friendly; padded rows/cols carry no
    # edges and the padded outputs are sliced off at the end.
    N_pad = -(-N // 32) * 32
    if N_pad != N:
        feat = jnp.pad(feat, ((0, N_pad - N), (0, 0)))
        adj = jnp.pad(adj, ((0, N_pad - N), (0, N_pad - N)))

    TM = _pick_tile(N_pad, row_tile)                         # projection row tile
    TV = _derive_dst_tile(N_pad, HD, H, dst_tile, vmem_limit)  # attention dst tile

    al_row = attn_l.reshape(1, HD).astype(jnp.float32)
    ar_row = attn_r.reshape(1, HD).astype(jnp.float32)

    # ---- Kernel 1: ft (bf16) + per-head a1/a2 (f32) ---------------------------
    proj = functools.partial(proj_kernel, num_heads=H, out_dim=D)
    ft, a1_nh, a2_nh = pl.pallas_call(
        proj,
        grid=(N_pad // TM,),
        in_specs=[
            pl.BlockSpec((TM, in_dim), lambda i: (i, 0)),
            pl.BlockSpec((in_dim, HD), lambda i: (0, 0)),    # W, loaded once
            pl.BlockSpec((1, HD), lambda i: (0, 0)),         # attn_l row
            pl.BlockSpec((1, HD), lambda i: (0, 0)),         # attn_r row
        ],
        out_specs=[
            pl.BlockSpec((TM, HD), lambda i: (i, 0)),
            pl.BlockSpec((TM, H), lambda i: (i, 0)),
            pl.BlockSpec((TM, H), lambda i: (i, 0)),
        ],
        out_shape=[
            jax.ShapeDtypeStruct((N_pad, HD), jnp.bfloat16),
            jax.ShapeDtypeStruct((N_pad, H), jnp.float32),
            jax.ShapeDtypeStruct((N_pad, H), jnp.float32),
        ],
        compiler_params=pltpu.CompilerParams(
            dimension_semantics=("parallel",),
            vmem_limit_bytes=vmem_limit),
        cost_estimate=pl.CostEstimate(
            flops=2 * N_pad * in_dim * HD + 4 * N_pad * HD,
            transcendentals=0,
            bytes_accessed=4 * N_pad * in_dim + 4 * in_dim * HD
                           + 2 * N_pad * HD + 8 * N_pad * H),
    )(feat, W, al_row, ar_row)

    # Tiny O(N*H) relayout so a1 is lane-dense (H, N) rows for the score tiles.
    a1_rows = a1_nh.T
    # int8 0/1 adjacency mask: quarter of an f32 adjacency stream in kernel 2.
    # TODO(synk): amortize this build across calls when adj is static.
    mask = (adj > 0).astype(jnp.int8)

    # ---- Kernel 2: attention + masked softmax + aggregation + ELU -------------
    attn = functools.partial(gat_attn_kernel, num_heads=H, out_dim=D,
                             use_bf16_exp=use_bf16_exp)
    out = pl.pallas_call(
        attn,
        grid=(N_pad // TV,),
        in_specs=[
            pl.BlockSpec((TV, N_pad), lambda t: (t, 0)),     # int8 adjacency tile
            pl.BlockSpec((N_pad, HD), lambda t: (0, 0)),     # ft (src side, bf16)
            pl.BlockSpec((H, N_pad), lambda t: (0, 0)),      # a1 rows, once
            pl.BlockSpec((TV, H), lambda t: (t, 0)),         # a2 dst block
        ],
        out_specs=pl.BlockSpec((TV, HD), lambda t: (t, 0)),
        out_shape=jax.ShapeDtypeStruct((N_pad, HD), jnp.float32),
        compiler_params=pltpu.CompilerParams(
            dimension_semantics=("parallel",),               # 2-TC sharding on v7x
            vmem_limit_bytes=vmem_limit),
        cost_estimate=pl.CostEstimate(
            flops=H * N_pad * N_pad * (2 * D + 10),
            transcendentals=H * N_pad * N_pad + N_pad * HD,
            bytes_accessed=N_pad * N_pad + 2 * N_pad * HD
                           + 4 * (N_pad * HD + H * N_pad + N_pad * H)),
    )(mask, ft, a1_rows, a2_nh)
    return out[:N]


def gat_layer_reference(feat, adj, W, attn_l, attn_r, num_heads, out_dim):
    N = feat.shape[0]
    H, D = num_heads, out_dim
    hp = jax.lax.Precision.HIGHEST
    ft = jnp.dot(feat, W, precision=hp)                      # (N, H*D)
    ftr = ft.reshape(N, H, D)
    a1 = jnp.einsum("nhd,hd->nh", ftr, attn_l, precision=hp)
    a2 = jnp.einsum("nhd,hd->nh", ftr, attn_r, precision=hp)
    s = a1.T[:, None, :] + a2.T[:, :, None]                  # (H, Nv, Nu)
    s = jnp.where(s > 0, s, LEAKY_ALPHA * s)
    s = jnp.where(adj[None] > 0, s, MASK_BIAS)
    attn = jax.nn.softmax(s, axis=-1)
    out = jnp.einsum("hvu,uhd->vhd", attn, ftr, precision=hp).reshape(N, H * D)
    return jax.nn.elu(out)


if __name__ == "__main__":
    # Small, deterministic problem size; H*D = 128 keeps output blocks lane-dense.
    N, in_dim, num_heads, out_dim = 256, 32, 4, 32

    key = jax.random.PRNGKey(0)
    k_feat, k_w, k_al, k_ar, k_adj = jax.random.split(key, 5)

    feat = jax.random.normal(k_feat, (N, in_dim), dtype=jnp.float32)
    # nn.Linear(in_dim, H*D, bias=False) weight, stored as (in_dim, H*D).
    W = jax.random.normal(k_w, (in_dim, num_heads * out_dim),
                          dtype=jnp.float32) * 0.1
    # attn_l / attn_r: torch.randn(num_heads, out_dim, 1) -> (H, D) here.
    attn_l = jax.random.normal(k_al, (num_heads, out_dim), dtype=jnp.float32)
    attn_r = jax.random.normal(k_ar, (num_heads, out_dim), dtype=jnp.float32)

    # Random directed graph as dense adjacency adj[dst, src], with self-loops.
    adj = (jax.random.uniform(k_adj, (N, N)) < 0.1).astype(jnp.float32)
    adj = jnp.maximum(adj, jnp.eye(N, dtype=jnp.float32))

    out = gat_layer_forward(feat, adj, W, attn_l, attn_r, num_heads, out_dim)
    out = jax.block_until_ready(out)

    ref = gat_layer_reference(feat, adj, W, attn_l, attn_r, num_heads, out_dim)
    # bf16 ft / bf16 unnormalized-p MXU operands, (optionally bf16) EUP exp and
    # the approx reciprocal => compare against the f32 reference at a relaxed
    # tolerance (inference-grade).
    np.testing.assert_allclose(np.asarray(out), np.asarray(ref),
                               rtol=2e-2, atol=2e-2)
    print("KERNEL_OK")
</pallas_src>

<mosaic_0001>
module attributes {stable_mosaic.version = 11 : i64} {
  func.func @proj_kernel(%arg0: i32, %arg1: memref<256x32xf32, #tpu.memory_space<vmem>>, %arg2: memref<32x128xf32, #tpu.memory_space<vmem>>, %arg3: memref<1x128xf32, #tpu.memory_space<vmem>>, %arg4: memref<1x128xf32, #tpu.memory_space<vmem>>, %arg5: memref<256x128xbf16, #tpu.memory_space<vmem>>, %arg6: memref<256x4xf32, #tpu.memory_space<vmem>>, %arg7: memref<256x4xf32, #tpu.memory_space<vmem>>) attributes {dimension_semantics = [#tpu.dimension_semantics<parallel>], iteration_bounds = array<i64: 1>, scalar_prefetch = 0 : i64, scratch_operands = 0 : i64, tpu.core_type = #tpu.core_type<tc>, window_params = [{transform_indices = @transform_0, window_bounds = array<i64: 256, 32>}, {pipeline_mode = #tpu.pipeline_mode<synchronous>, transform_indices = @transform_1, window_bounds = array<i64: 32, 128>}, {pipeline_mode = #tpu.pipeline_mode<synchronous>, transform_indices = @transform_2, window_bounds = array<i64: 1, 128>}, {pipeline_mode = #tpu.pipeline_mode<synchronous>, transform_indices = @transform_3, window_bounds = array<i64: 1, 128>}, {transform_indices = @transform_4, window_bounds = array<i64: 256, 128>}, {transform_indices = @transform_5, window_bounds = array<i64: 256, 4>}, {transform_indices = @transform_6, window_bounds = array<i64: 256, 4>}]} {
    %c0 = arith.constant 0 : index
    %c0_0 = arith.constant 0 : index
    %0 = vector.load %arg1[%c0, %c0_0] : memref<256x32xf32, #tpu.memory_space<vmem>>, vector<256x32xf32>
    %c0_1 = arith.constant 0 : index
    %c0_2 = arith.constant 0 : index
    %1 = vector.load %arg2[%c0_1, %c0_2] : memref<32x128xf32, #tpu.memory_space<vmem>>, vector<32x128xf32>
    %cst = arith.constant dense<0.000000e+00> : vector<256x128xf32>
    %2 = tpu.matmul %0, %1, %cst {dimension_numbers = #tpu.dot_dimension_numbers<[1], [0], [0], [1], [0, 0, 1, 1], [], []>} : vector<256x32xf32>, vector<32x128xf32>, vector<256x128xf32> -> vector<256x128xf32>
    %3 = arith.truncf %2 : vector<256x128xf32> to vector<256x128xbf16>
    %c0_3 = arith.constant 0 : index
    %c0_4 = arith.constant 0 : index
    %4 = vector.load %arg5[%c0_3, %c0_4] : memref<256x128xbf16, #tpu.memory_space<vmem>>, vector<256x128xbf16>
    tpu.vector_store %arg5[%c0_3, %c0_4], %3 {strides = array<i32>} : memref<256x128xbf16, #tpu.memory_space<vmem>>, vector<256x128xbf16>,
    %c0_5 = arith.constant 0 : index
    %c0_6 = arith.constant 0 : index
    %5 = vector.load %arg3[%c0_5, %c0_6] : memref<1x128xf32, #tpu.memory_space<vmem>>, vector<1x128xf32>
    %c0_7 = arith.constant 0 : index
    %c0_8 = arith.constant 0 : index
    %6 = vector.load %arg4[%c0_7, %c0_8] : memref<1x128xf32, #tpu.memory_space<vmem>>, vector<1x128xf32>
    %7 = vector.extract_strided_slice %2 {offsets = [0, 0], sizes = [256, 32], strides = [1, 1]} : vector<256x128xf32> to vector<256x32xf32>
    %8 = vector.extract_strided_slice %5 {offsets = [0, 0], sizes = [1, 32], strides = [1, 1]} : vector<1x128xf32> to vector<1x32xf32>
    %9 = vector.broadcast %8 : vector<1x32xf32> to vector<256x32xf32>
    %10 = arith.mulf %7, %9 : vector<256x32xf32>
    %cst_9 = arith.constant dense<0.000000e+00> : vector<256xf32>
    %11 = vector.multi_reduction <add>, %10, %cst_9 [1] : vector<256x32xf32> to vector<256xf32>
    %12 = vector.shape_cast %11 : vector<256xf32> to vector<256x1xf32>
    %13 = vector.extract_strided_slice %2 {offsets = [0, 0], sizes = [256, 32], strides = [1, 1]} : vector<256x128xf32> to vector<256x32xf32>
    %14 = vector.extract_strided_slice %6 {offsets = [0, 0], sizes = [1, 32], strides = [1, 1]} : vector<1x128xf32> to vector<1x32xf32>
    %15 = vector.broadcast %14 : vector<1x32xf32> to vector<256x32xf32>
    %16 = arith.mulf %13, %15 : vector<256x32xf32>
    %cst_10 = arith.constant dense<0.000000e+00> : vector<256xf32>
    %17 = vector.multi_reduction <add>, %16, %cst_10 [1] : vector<256x32xf32> to vector<256xf32>
    %18 = vector.shape_cast %17 : vector<256xf32> to vector<256x1xf32>
    %19 = vector.extract_strided_slice %2 {offsets = [0, 32], sizes = [256, 32], strides = [1, 1]} : vector<256x128xf32> to vector<256x32xf32>
    %20 = vector.extract_strided_slice %5 {offsets = [0, 32], sizes = [1, 32], strides = [1, 1]} : vector<1x128xf32> to vector<1x32xf32>
    %21 = vector.broadcast %20 : vector<1x32xf32> to vector<256x32xf32>
    %22 = arith.mulf %19, %21 : vector<256x32xf32>
    %cst_11 = arith.constant dense<0.000000e+00> : vector<256xf32>
    %23 = vector.multi_reduction <add>, %22, %cst_11 [1] : vector<256x32xf32> to vector<256xf32>
    %24 = vector.shape_cast %23 : vector<256xf32> to vector<256x1xf32>
    %25 = vector.extract_strided_slice %2 {offsets = [0, 32], sizes = [256, 32], strides = [1, 1]} : vector<256x128xf32> to vector<256x32xf32>
    %26 = vector.extract_strided_slice %6 {offsets = [0, 32], sizes = [1, 32], strides = [1, 1]} : vector<1x128xf32> to vector<1x32xf32>
    %27 = vector.broadcast %26 : vector<1x32xf32> to vector<256x32xf32>
    %28 = arith.mulf %25, %27 : vector<256x32xf32>
    %cst_12 = arith.constant dense<0.000000e+00> : vector<256xf32>
    %29 = vector.multi_reduction <add>, %28, %cst_12 [1] : vector<256x32xf32> to vector<256xf32>
    %30 = vector.shape_cast %29 : vector<256xf32> to vector<256x1xf32>
    %31 = vector.extract_strided_slice %2 {offsets = [0, 64], sizes = [256, 32], strides = [1, 1]} : vector<256x128xf32> to vector<256x32xf32>
    %32 = vector.extract_strided_slice %5 {offsets = [0, 64], sizes = [1, 32], strides = [1, 1]} : vector<1x128xf32> to vector<1x32xf32>
    %33 = vector.broadcast %32 : vector<1x32xf32> to vector<256x32xf32>
    %34 = arith.mulf %31, %33 : vector<256x32xf32>
    %cst_13 = arith.constant dense<0.000000e+00> : vector<256xf32>
    %35 = vector.multi_reduction <add>, %34, %cst_13 [1] : vector<256x32xf32> to vector<256xf32>
    %36 = vector.shape_cast %35 : vector<256xf32> to vector<256x1xf32>
    %37 = vector.extract_strided_slice %2 {offsets = [0, 64], sizes = [256, 32], strides = [1, 1]} : vector<256x128xf32> to vector<256x32xf32>
    %38 = vector.extract_strided_slice %6 {offsets = [0, 64], sizes = [1, 32], strides = [1, 1]} : vector<1x128xf32> to vector<1x32xf32>
    %39 = vector.broadcast %38 : vector<1x32xf32> to vector<256x32xf32>
    %40 = arith.mulf %37, %39 : vector<256x32xf32>
    %cst_14 = arith.constant dense<0.000000e+00> : vector<256xf32>
    %41 = vector.multi_reduction <add>, %40, %cst_14 [1] : vector<256x32xf32> to vector<256xf32>
    %42 = vector.shape_cast %41 : vector<256xf32> to vector<256x1xf32>
    %43 = vector.extract_strided_slice %2 {offsets = [0, 96], sizes = [256, 32], strides = [1, 1]} : vector<256x128xf32> to vector<256x32xf32>
    %44 = vector.extract_strided_slice %5 {offsets = [0, 96], sizes = [1, 32], strides = [1, 1]} : vector<1x128xf32> to vector<1x32xf32>
    %45 = vector.broadcast %44 : vector<1x32xf32> to vector<256x32xf32>
    %46 = arith.mulf %43, %45 : vector<256x32xf32>
    %cst_15 = arith.constant dense<0.000000e+00> : vector<256xf32>
    %47 = vector.multi_reduction <add>, %46, %cst_15 [1] : vector<256x32xf32> to vector<256xf32>
    %48 = vector.shape_cast %47 : vector<256xf32> to vector<256x1xf32>
    %49 = vector.extract_strided_slice %2 {offsets = [0, 96], sizes = [256, 32], strides = [1, 1]} : vector<256x128xf32> to vector<256x32xf32>
    %50 = vector.extract_strided_slice %6 {offsets = [0, 96], sizes = [1, 32], strides = [1, 1]} : vector<1x128xf32> to vector<1x32xf32>
    %51 = vector.broadcast %50 : vector<1x32xf32> to vector<256x32xf32>
    %52 = arith.mulf %49, %51 : vector<256x32xf32>
    %cst_16 = arith.constant dense<0.000000e+00> : vector<256xf32>
    %53 = vector.multi_reduction <add>, %52, %cst_16 [1] : vector<256x32xf32> to vector<256xf32>
    %54 = vector.shape_cast %53 : vector<256xf32> to vector<256x1xf32>
    %55 = tpu.concatenate %12, %24, %36, %48 in 1 : vector<256x1xf32>, vector<256x1xf32>, vector<256x1xf32>, vector<256x1xf32> -> vector<256x4xf32>
    %c0_17 = arith.constant 0 : index
    %c0_18 = arith.constant 0 : index
    %56 = vector.load %arg6[%c0_17, %c0_18] : memref<256x4xf32, #tpu.memory_space<vmem>>, vector<256x4xf32>
    tpu.vector_store %arg6[%c0_17, %c0_18], %55 {strides = array<i32>} : memref<256x4xf32, #tpu.memory_space<vmem>>, vector<256x4xf32>,
    %57 = tpu.concatenate %18, %30, %42, %54 in 1 : vector<256x1xf32>, vector<256x1xf32>, vector<256x1xf32>, vector<256x1xf32> -> vector<256x4xf32>
    %c0_19 = arith.constant 0 : index
    %c0_20 = arith.constant 0 : index
    %58 = vector.load %arg7[%c0_19, %c0_20] : memref<256x4xf32, #tpu.memory_space<vmem>>, vector<256x4xf32>
    tpu.vector_store %arg7[%c0_19, %c0_20], %57 {strides = array<i32>} : memref<256x4xf32, #tpu.memory_space<vmem>>, vector<256x4xf32>,
    return
  }
  func.func @transform_0(%arg0: i32) -> (i32, i32) {
    %c0_i32 = arith.constant 0 : i32
    %c0_i32_0 = arith.constant 0 : i32
    return %arg0, %c0_i32 : i32, i32
  }
  func.func @transform_1(%arg0: i32) -> (i32, i32) {
    %c0_i32 = arith.constant 0 : i32
    %c0_i32_0 = arith.constant 0 : i32
    %c0_i32_1 = arith.constant 0 : i32
    return %c0_i32, %c0_i32_0 : i32, i32
  }
  func.func @transform_2(%arg0: i32) -> (i32, i32) {
    %c0_i32 = arith.constant 0 : i32
    %c0_i32_0 = arith.constant 0 : i32
    %c0_i32_1 = arith.constant 0 : i32
    return %c0_i32, %c0_i32_0 : i32, i32
  }
  func.func @transform_3(%arg0: i32) -> (i32, i32) {
    %c0_i32 = arith.constant 0 : i32
    %c0_i32_0 = arith.constant 0 : i32
    %c0_i32_1 = arith.constant 0 : i32
    return %c0_i32, %c0_i32_0 : i32, i32
  }
  func.func @transform_4(%arg0: i32) -> (i32, i32) {
    %c0_i32 = arith.constant 0 : i32
    %c0_i32_0 = arith.constant 0 : i32
    return %arg0, %c0_i32 : i32, i32
  }
  func.func @transform_5(%arg0: i32) -> (i32, i32) {
    %c0_i32 = arith.constant 0 : i32
    %c0_i32_0 = arith.constant 0 : i32
    return %arg0, %c0_i32 : i32, i32
  }
  func.func @transform_6(%arg0: i32) -> (i32, i32) {
    %c0_i32 = arith.constant 0 : i32
    %c0_i32_0 = arith.constant 0 : i32
    return %arg0, %c0_i32 : i32, i32
  }
}

</mosaic_0001>

<llo_original>
// kernel: tpu_custom_call.1
$region0: #{tpu_custom_call.1}
  #allocation0 [shape = 'u32[]', space=smem, size = 0x4, offset = 0x4, fixed_abs, tag = 'smem constant byte address 0x4 - core index']
  #allocation1 [shape = 'u32[144,128]{1,0:T(1,128)}', space=vmem, size = 0x12000, scoped, tag = 'internal scratch']
  %s0 = inlined_call_operand.vmem [shape: f32[256,32], index: 0, kind: input, shape index: {}]
  %s1 = inlined_call_operand.vmem [shape: f32[32,128], index: 1, kind: input, shape index: {}]
  %s2 = inlined_call_operand.vmem [shape: f32[1,128], index: 2, kind: input, shape index: {}]
  %s3 = inlined_call_operand.vmem [shape: f32[1,128], index: 3, kind: input, shape index: {}]
  %s4 = inlined_call_operand.hbm [shape: bf16[256,128], index: 4, kind: output, shape index: {0}]
  %s5 = inlined_call_operand.vmem [shape: f32[256,4], index: 5, kind: output, shape index: {1}]
  %s6 = inlined_call_operand.vmem [shape: f32[256,4], index: 6, kind: output, shape index: {2}]
  %7 = xla_tuple %s4, %s5, %s6
  %s8 = sld [smem:[#allocation0]]
  $region42: #{tpu_custom_call.1} parent=0
    _
  %s10 = ssub.s32 1, %s8
  %s11 = scalar_select 0, %s10, %s8
  $region1: #{tpu_custom_call.1} parent=0
    #allocation2 [shape = 'u8[65536]{0}', space=vmem, size = 0x10000, scoped, tag = 'output window, operand 0, single buffered']
    #allocation3 [shape = 's32[1]{0}', space=sflag, size = 0x4, scoped, tag = 'scoped memory for tpu_custom_call.1']
    %12 = vsyncpa [#allocation3], 0
    // Predicated region
    $region2: #{tpu_custom_call.1} parent=1 // pred_check
      _
    $region3: #{tpu_custom_call.1} parent=1 // pred_check_branch
      %14 = sbr.rel (0) target = $region5
    $region4: #{tpu_custom_call.1} parent=1 // pred_region
      _
    $region5: #{tpu_custom_call.1} parent=1 // pred_fallthru
      _
    // Predicated region
    $region6: #{tpu_custom_call.1} parent=1 // pred_check
      _
    $region7: #{tpu_custom_call.1} parent=1 // pred_check_branch
      %16 = sbr.rel (0) target = $region9
    $region8: #{tpu_custom_call.1} parent=1 // pred_region
      _
    $region9: #{tpu_custom_call.1} parent=1 // pred_fallthru
      _
    // Predicated region
    $region10: #{tpu_custom_call.1} parent=1 // pred_check
      _
    $region11: #{tpu_custom_call.1} parent=1 // pred_check_branch
      %18 = sbr.rel (0) target = $region13
    $region12: #{tpu_custom_call.1} parent=1 // pred_region
      _
    $region13: #{tpu_custom_call.1} parent=1 // pred_fallthru
      _
    // Predicated region
    $region14: #{tpu_custom_call.1} parent=1 // pred_check
      _
    $region15: #{tpu_custom_call.1} parent=1 // pred_check_branch
      %20 = sbr.rel (0) target = $region17
    $region16: #{tpu_custom_call.1} parent=1 // pred_region
      _
    $region17: #{tpu_custom_call.1} parent=1 // pred_fallthru
      _
    %v21 = vld [vmem:[%s0] sm:$0xff]
    %v22 = vld [vmem:[%s0 + $0x8] sm:$0xff]
    %v23 = vld [vmem:[%s0 + $0x10] sm:$0xff]
    %v24 = vld [vmem:[%s0 + $0x18] sm:$0xff]
    %v25 = vld [vmem:[%s0 + $0x20] sm:$0xff]
    %v26 = vld [vmem:[%s0 + $0x28] sm:$0xff]
    %v27 = vld [vmem:[%s0 + $0x30] sm:$0xff]
    %v28 = vld [vmem:[%s0 + $0x38] sm:$0xff]
    %v29 = vld [vmem:[%s0 + $0x40] sm:$0xff]
    %v30 = vld [vmem:[%s0 + $0x48] sm:$0xff]
    %v31 = vld [vmem:[%s0 + $0x50] sm:$0xff]
    %v32 = vld [vmem:[%s0 + $0x58] sm:$0xff]
    %v33 = vld [vmem:[%s0 + $0x60] sm:$0xff]
    %v34 = vld [vmem:[%s0 + $0x68] sm:$0xff]
    %v35 = vld [vmem:[%s0 + $0x70] sm:$0xff]
    %v36 = vld [vmem:[%s0 + $0x78] sm:$0xff]
    %v37 = vld [vmem:[%s0 + $0x80] sm:$0xff]
    %v38 = vld [vmem:[%s0 + $0x88] sm:$0xff]
    %v39 = vld [vmem:[%s0 + $0x90] sm:$0xff]
    %v40 = vld [vmem:[%s0 + $0x98] sm:$0xff]
    %v41 = vld [vmem:[%s0 + $0xa0] sm:$0xff]
    %v42 = vld [vmem:[%s0 + $0xa8] sm:$0xff]
    %v43 = vld [vmem:[%s0 + $0xb0] sm:$0xff]
    %v44 = vld [vmem:[%s0 + $0xb8] sm:$0xff]
    %v45 = vld [vmem:[%s0 + $0xc0] sm:$0xff]
    %v46 = vld [vmem:[%s0 + $0xc8] sm:$0xff]
    %v47 = vld [vmem:[%s0 + $0xd0] sm:$0xff]
    %v48 = vld [vmem:[%s0 + $0xd8] sm:$0xff]
    %v49 = vld [vmem:[%s0 + $0xe0] sm:$0xff]
    %v50 = vld [vmem:[%s0 + $0xe8] sm:$0xff]
    %v51 = vld [vmem:[%s0 + $0xf0] sm:$0xff]
    %v52 = vld [vmem:[%s0 + $0xf8] sm:$0xff]
    %v53 = vld [vmem:[%s1] sm:$0xff]
    %v54 = vld [vmem:[%s1 + $0x8] sm:$0xff]
    %v55 = vld [vmem:[%s1 + $0x10] sm:$0xff]
    %v56 = vld [vmem:[%s1 + $0x18] sm:$0xff]
    %vm57 = vcmask 261120
    %v59 = vsel %vm57, %v21, 0
    %v62 = vsel %vm57, %v22, 0
    %v65 = vsel %vm57, %v23, 0
    %v68 = vsel %vm57, %v24, 0
    %v71 = vsel %vm57, %v25, 0
    %v74 = vsel %vm57, %v26, 0
    %v77 = vsel %vm57, %v27, 0
    %v80 = vsel %vm57, %v28, 0
    %v83 = vsel %vm57, %v29, 0
    %v86 = vsel %vm57, %v30, 0
    %v89 = vsel %vm57, %v31, 0
    %v92 = vsel %vm57, %v32, 0
    %v95 = vsel %vm57, %v33, 0
    %v98 = vsel %vm57, %v34, 0
    %v101 = vsel %vm57, %v35, 0
    %v104 = vsel %vm57, %v36, 0
    %v107 = vsel %vm57, %v37, 0
    %v110 = vsel %vm57, %v38, 0
    %v113 = vsel %vm57, %v39, 0
    %v116 = vsel %vm57, %v40, 0
    %v119 = vsel %vm57, %v41, 0
    %v122 = vsel %vm57, %v42, 0
    %v125 = vsel %vm57, %v43, 0
    %v128 = vsel %vm57, %v44, 0
    %v131 = vsel %vm57, %v45, 0
    %v134 = vsel %vm57, %v46, 0
    %v137 = vsel %vm57, %v47, 0
    %v140 = vsel %vm57, %v48, 0
    %v143 = vsel %vm57, %v49, 0
    %v146 = vsel %vm57, %v50, 0
    %v149 = vsel %vm57, %v51, 0
    %v152 = vsel %vm57, %v52, 0
    %154 = vmatprep.subr.mxu0 0.0
    %155 = vmatpush1.msra.mxu0 0.0
    %156 = vmatprep.subr.mxu0 0.0
    %157 = vmatpush1.msra.mxu0 0.0
    %158 = vmatprep.subr.mxu0 0.0
    %159 = vmatpush1.msra.mxu0 0.0
    %160 = vmatprep.subr.mxu0 0.0
    %161 = vmatpush1.msra.mxu0 0.0
    %162 = vmatprep.subr.mxu0 0.0
    %163 = vmatpush1.msra.mxu0 0.0
    %164 = vmatprep.subr.mxu0 0.0
    %165 = vmatpush1.msra.mxu0 0.0
    %166 = vmatprep.subr.mxu0 0.0
    %167 = vmatpush1.msra.mxu0 0.0
    %168 = vmatprep.subr.mxu0 0.0
    %169 = vmatpush1.msra.mxu0 0.0
    %170 = vmatprep.subr.mxu0 0.0
    %171 = vmatpush1.msra.mxu0 0.0
    %172 = vmatprep.subr.mxu0 0.0
    %173 = vmatpush1.msra.mxu0 0.0
    %174 = vmatprep.subr.mxu0 0.0
    %175 = vmatpush1.msra.mxu0 0.0
    %176 = vmatprep.subr.mxu0 0.0
    %177 = vmatpush1.msra.mxu0 0.0
    %178 = vmatprep.subr.mxu0 0.0
    %179 = vmatpush1.msra.mxu0 %v56
    %180 = vmatprep.subr.mxu0 0.0
    %181 = vmatpush1.msra.mxu0 %v55
    %182 = vmatprep.subr.mxu0 0.0
    %183 = vmatpush1.msra.mxu0 %v54
    %184 = vmatprep.subr.mxu0 0.0
    %185 = vmatpush1.msra.mxu0 %v53
    %186 = vmatprep.subr.mxu0 0.0
    %187 = vmatpush2.msra.mxu0 0.0
    %188 = vmatprep.subr.mxu0 0.0
    %189 = vmatpush2.msra.mxu0 0.0
    %190 = vmatprep.subr.mxu0 0.0
    %191 = vmatpush2.msra.mxu0 0.0
    %192 = vmatprep.subr.mxu0 0.0
    %193 = vmatpush2.msra.mxu0 0.0
    %194 = vmatprep.subr.mxu0 0.0
    %195 = vmatpush2.msra.mxu0 0.0
    %196 = vmatprep.subr.mxu0 0.0
    %197 = vmatpush2.msra.mxu0 0.0
    %198 = vmatprep.subr.mxu0 0.0
    %199 = vmatpush2.msra.mxu0 0.0
    %200 = vmatprep.subr.mxu0 0.0
    %201 = vmatpush2.msra.mxu0 0.0
    %202 = vmatprep.subr.mxu0 0.0
    %203 = vmatpush2.msra.mxu0 0.0
    %204 = vmatprep.subr.mxu0 0.0
    %205 = vmatpush2.msra.mxu0 0.0
    %206 = vmatprep.subr.mxu0 0.0
    %207 = vmatpush2.msra.mxu0 0.0
    %208 = vmatprep.subr.mxu0 0.0
    %209 = vmatpush2.msra.mxu0 0.0
    %210 = vmatprep.subr.mxu0 0.0
    %211 = vmatpush2.msra.mxu0 0.0
    %212 = vmatprep.subr.mxu0 0.0
    %213 = vmatpush2.msra.mxu0 0.0
    %214 = vmatprep.subr.mxu0 0.0
    %215 = vmatpush2.msra.mxu0 0.0
    %216 = vmatprep.subr.mxu0 0.0
    %217 = vmatpush2.msra.mxu0 0.0
    %218 = vmatprep.mubr.f32.mxu0 0.0
    %219 = vmatmul.mubr.f32.gmra.mxu0 %v59
    %v220 = vpop.f32.mrf.mxu0
    %v221 = vadd.f32 0.0, %v220
    %v222 = vpop.f32.mrf.mxu0
    %223 = vmatprep.mubr.f32.mxu0 0.0
    %224 = vmatmul.mubr.f32.gmra.mxu0 %v62
    %v225 = vpop.f32.mrf.mxu0
    %v226 = vadd.f32 0.0, %v225
    %v227 = vpop.f32.mrf.mxu0
    %228 = vmatprep.mubr.f32.mxu0 0.0
    %229 = vmatmul.mubr.f32.gmra.mxu0 %v65
    %v230 = vpop.f32.mrf.mxu0
    %v231 = vadd.f32 0.0, %v230
    %v232 = vpop.f32.mrf.mxu0
    %233 = vmatprep.mubr.f32.mxu0 0.0
    %234 = vmatmul.mubr.f32.gmra.mxu0 %v68
    %v235 = vpop.f32.mrf.mxu0
    %v236 = vadd.f32 0.0, %v235
    %v237 = vpop.f32.mrf.mxu0
    %238 = vmatprep.mubr.f32.mxu0 0.0
    %239 = vmatmul.mubr.f32.gmra.mxu0 %v71
    %v240 = vpop.f32.mrf.mxu0
    %v241 = vadd.f32 0.0, %v240
    %v242 = vpop.f32.mrf.mxu0
    %243 = vmatprep.mubr.f32.mxu0 0.0
    %244 = vmatmul.mubr.f32.gmra.mxu0 %v74
    %v245 = vpop.f32.mrf.mxu0
    %v246 = vadd.f32 0.0, %v245
    %v247 = vpop.f32.mrf.mxu0
    %248 = vmatprep.mubr.f32.mxu0 0.0
    %249 = vmatmul.mubr.f32.gmra.mxu0 %v77
    %v250 = vpop.f32.mrf.mxu0
    %v251 = vadd.f32 0.0, %v250
    %v252 = vpop.f32.mrf.mxu0
    %253 = vmatprep.mubr.f32.mxu0 0.0
    %254 = vmatmul.mubr.f32.gmra.mxu0 %v80
    %v255 = vpop.f32.mrf.mxu0
    %v256 = vadd.f32 0.0, %v255
    %v257 = vpop.f32.mrf.mxu0
    %258 = vmatprep.mubr.f32.mxu0 0.0
    %259 = vmatmul.mubr.f32.gmra.mxu0 %v83
    %v260 = vpop.f32.mrf.mxu0
    %v261 = vadd.f32 0.0, %v260
    %v262 = vpop.f32.mrf.mxu0
    %263 = vmatprep.mubr.f32.mxu0 0.0
    %264 = vmatmul.mubr.f32.gmra.mxu0 %v86
    %v265 = vpop.f32.mrf.mxu0
    %v266 = vadd.f32 0.0, %v265
    %v267 = vpop.f32.mrf.mxu0
    %268 = vmatprep.mubr.f32.mxu0 0.0
    %269 = vmatmul.mubr.f32.gmra.mxu0 %v89
    %v270 = vpop.f32.mrf.mxu0
    %v271 = vadd.f32 0.0, %v270
    %v272 = vpop.f32.mrf.mxu0
    %273 = vmatprep.mubr.f32.mxu0 0.0
    %274 = vmatmul.mubr.f32.gmra.mxu0 %v92
    %v275 = vpop.f32.mrf.mxu0
    %v276 = vadd.f32 0.0, %v275
    %v277 = vpop.f32.mrf.mxu0
    %278 = vmatprep.mubr.f32.mxu0 0.0
    %279 = vmatmul.mubr.f32.gmra.mxu0 %v95
    %v280 = vpop.f32.mrf.mxu0
    %v281 = vadd.f32 0.0, %v280
    %v282 = vpop.f32.mrf.mxu0
    %283 = vmatprep.mubr.f32.mxu0 0.0
    %284 = vmatmul.mubr.f32.gmra.mxu0 %v98
    %v285 = vpop.f32.mrf.mxu0
    %v286 = vadd.f32 0.0, %v285
    %v287 = vpop.f32.mrf.mxu0
    %288 = vmatprep.mubr.f32.mxu0 0.0
    %289 = vmatmul.mubr.f32.gmra.mxu0 %v101
    %v290 = vpop.f32.mrf.mxu0
    %v291 = vadd.f32 0.0, %v290
    %v292 = vpop.f32.mrf.mxu0
    %293 = vmatprep.mubr.f32.mxu0 0.0
    %294 = vmatmul.mubr.f32.gmra.mxu0 %v104
    %v295 = vpop.f32.mrf.mxu0
    %v296 = vadd.f32 0.0, %v295
    %v297 = vpop.f32.mrf.mxu0
    %298 = vmatprep.mubr.f32.mxu0 0.0
    %299 = vmatmul.mubr.f32.gmra.mxu0 %v107
    %v300 = vpop.f32.mrf.mxu0
    %v301 = vadd.f32 0.0, %v300
    %v302 = vpop.f32.mrf.mxu0
    %303 = vmatprep.mubr.f32.mxu0 0.0
    %304 = vmatmul.mubr.f32.gmra.mxu0 %v110
    %v305 = vpop.f32.mrf.mxu0
    %v306 = vadd.f32 0.0, %v305
    %v307 = vpop.f32.mrf.mxu0
    %308 = vmatprep.mubr.f32.mxu0 0.0
    %309 = vmatmul.mubr.f32.gmra.mxu0 %v113
    %v310 = vpop.f32.mrf.mxu0
    %v311 = vadd.f32 0.0, %v310
    %v312 = vpop.f32.mrf.mxu0
    %313 = vmatprep.mubr.f32.mxu0 0.0
    %314 = vmatmul.mubr.f32.gmra.mxu0 %v116
    %v315 = vpop.f32.mrf.mxu0
    %v316 = vadd.f32 0.0, %v315
    %v317 = vpop.f32.mrf.mxu0
    %318 = vmatprep.mubr.f32.mxu0 0.0
    %319 = vmatmul.mubr.f32.gmra.mxu0 %v119
    %v320 = vpop.f32.mrf.mxu0
    %v321 = vadd.f32 0.0, %v320
    %v322 = vpop.f32.mrf.mxu0
    %323 = vmatprep.mubr.f32.mxu0 0.0
    %324 = vmatmul.mubr.f32.gmra.mxu0 %v122
    %v325 = vpop.f32.mrf.mxu0
    %v326 = vadd.f32 0.0, %v325
    %v327 = vpop.f32.mrf.mxu0
    %328 = vmatprep.mubr.f32.mxu0 0.0
    %329 = vmatmul.mubr.f32.gmra.mxu0 %v125
    %v330 = vpop.f32.mrf.mxu0
    %v331 = vadd.f32 0.0, %v330
    %v332 = vpop.f32.mrf.mxu0
    %333 = vmatprep.mubr.f32.mxu0 0.0
    %334 = vmatmul.mubr.f32.gmra.mxu0 %v128
    %v335 = vpop.f32.mrf.mxu0
    %v336 = vadd.f32 0.0, %v335
    %v337 = vpop.f32.mrf.mxu0
    %338 = vmatprep.mubr.f32.mxu0 0.0
    %339 = vmatmul.mubr.f32.gmra.mxu0 %v131
    %v340 = vpop.f32.mrf.mxu0
    %v341 = vadd.f32 0.0, %v340
    %v342 = vpop.f32.mrf.mxu0
    %343 = vmatprep.mubr.f32.mxu0 0.0
    %344 = vmatmul.mubr.f32.gmra.mxu0 %v134
    %v345 = vpop.f32.mrf.mxu0
    %v346 = vadd.f32 0.0, %v345
    %v347 = vpop.f32.mrf.mxu0
    %348 = vmatprep.mubr.f32.mxu0 0.0
    %349 = vmatmul.mubr.f32.gmra.mxu0 %v137
    %v350 = vpop.f32.mrf.mxu0
    %v351 = vadd.f32 0.0, %v350
    %v352 = vpop.f32.mrf.mxu0
    %353 = vmatprep.mubr.f32.mxu0 0.0
    %354 = vmatmul.mubr.f32.gmra.mxu0 %v140
    %v355 = vpop.f32.mrf.mxu0
    %v356 = vadd.f32 0.0, %v355
    %v357 = vpop.f32.mrf.mxu0
    %358 = vmatprep.mubr.f32.mxu0 0.0
    %359 = vmatmul.mubr.f32.gmra.mxu0 %v143
    %v360 = vpop.f32.mrf.mxu0
    %v361 = vadd.f32 0.0, %v360
    %v362 = vpop.f32.mrf.mxu0
    %363 = vmatprep.mubr.f32.mxu0 0.0
    %364 = vmatmul.mubr.f32.gmra.mxu0 %v146
    %v365 = vpop.f32.mrf.mxu0
    %v366 = vadd.f32 0.0, %v365
    %v367 = vpop.f32.mrf.mxu0
    %368 = vmatprep.mubr.f32.mxu0 0.0
    %369 = vmatmul.mubr.f32.gmra.mxu0 %v149
    %v370 = vpop.f32.mrf.mxu0
    %v371 = vadd.f32 0.0, %v370
    %v372 = vpop.f32.mrf.mxu0
    %373 = vmatprep.mubr.f32.mxu0 0.0
    %374 = vmatmul.mubr.f32.gmra.mxu0 %v152
    %v375 = vpop.f32.mrf.mxu0
    %v376 = vadd.f32 0.0, %v375
    %v377 = vpop.f32.mrf.mxu0
    %378 = vdwg.mxu0
    %v379 = vpack.c.bf16 %v226, %v221
    %v380 = vpack.c.bf16 %v236, %v231
    %v381 = vpack.c.bf16 %v246, %v241
    %v382 = vpack.c.bf16 %v256, %v251
    %v383 = vpack.c.bf16 %v266, %v261
    %v384 = vpack.c.bf16 %v276, %v271
    %v385 = vpack.c.bf16 %v286, %v281
    %v386 = vpack.c.bf16 %v296, %v291
    %v387 = vpack.c.bf16 %v306, %v301
    %v388 = vpack.c.bf16 %v316, %v311
    %v389 = vpack.c.bf16 %v326, %v321
    %v390 = vpack.c.bf16 %v336, %v331
    %v391 = vpack.c.bf16 %v346, %v341
    %v392 = vpack.c.bf16 %v356, %v351
    %v393 = vpack.c.bf16 %v366, %v361
    %v394 = vpack.c.bf16 %v376, %v371
    %v411 = vunpack.c.l.b16 %v379
    %v412 = vunpack.c.h.b16 %v379
    %v413 = vunpack.c.l.b16 %v380
    %v414 = vunpack.c.h.b16 %v380
    %v415 = vunpack.c.l.b16 %v381
    %v416 = vunpack.c.h.b16 %v381
    %v417 = vunpack.c.l.b16 %v382
    %v418 = vunpack.c.h.b16 %v382
    %v419 = vunpack.c.l.b16 %v383
    %v420 = vunpack.c.h.b16 %v383
    %v421 = vunpack.c.l.b16 %v384
    %v422 = vunpack.c.h.b16 %v384
    %v423 = vunpack.c.l.b16 %v385
    %v424 = vunpack.c.h.b16 %v385
    %v425 = vunpack.c.l.b16 %v386
    %v426 = vunpack.c.h.b16 %v386
    %v427 = vunpack.c.l.b16 %v387
    %v428 = vunpack.c.h.b16 %v387
    %v429 = vunpack.c.l.b16 %v388
    %v430 = vunpack.c.h.b16 %v388
    %v431 = vunpack.c.l.b16 %v389
    %v432 = vunpack.c.h.b16 %v389
    %v433 = vunpack.c.l.b16 %v390
    %v434 = vunpack.c.h.b16 %v390
    %v435 = vunpack.c.l.b16 %v391
    %v436 = vunpack.c.h.b16 %v391
    %v437 = vunpack.c.l.b16 %v392
    %v438 = vunpack.c.h.b16 %v392
    %v439 = vunpack.c.l.b16 %v393
    %v440 = vunpack.c.h.b16 %v393
    %v441 = vunpack.c.l.b16 %v394
    %v442 = vunpack.c.h.b16 %v394
    %v443 = vpack.c.b16 %v411, %v411
    %v444 = vpack.c.b16 %v412, %v412
    %v445 = vpack.c.b16 %v413, %v413
    %v446 = vpack.c.b16 %v414, %v414
    %v447 = vpack.c.b16 %v415, %v415
    %v448 = vpack.c.b16 %v416, %v416
    %v449 = vpack.c.b16 %v417, %v417
    %v450 = vpack.c.b16 %v418, %v418
    %v451 = vpack.c.b16 %v419, %v419
    %v452 = vpack.c.b16 %v420, %v420
    %v453 = vpack.c.b16 %v421, %v421
    %v454 = vpack.c.b16 %v422, %v422
    %v455 = vpack.c.b16 %v423, %v423
    %v456 = vpack.c.b16 %v424, %v424
    %v457 = vpack.c.b16 %v425, %v425
    %v458 = vpack.c.b16 %v426, %v426
    %v459 = vpack.c.b16 %v427, %v427
    %v460 = vpack.c.b16 %v428, %v428
    %v461 = vpack.c.b16 %v429, %v429
    %v462 = vpack.c.b16 %v430, %v430
    %v463 = vpack.c.b16 %v431, %v431
    %v464 = vpack.c.b16 %v432, %v432
    %v465 = vpack.c.b16 %v433, %v433
    %v466 = vpack.c.b16 %v434, %v434
    %v467 = vpack.c.b16 %v435, %v435
    %v468 = vpack.c.b16 %v436, %v436
    %v469 = vpack.c.b16 %v437, %v437
    %v470 = vpack.c.b16 %v438, %v438
    %v471 = vpack.c.b16 %v439, %v439
    %v472 = vpack.c.b16 %v440, %v440
    %v473 = vpack.c.b16 %v441, %v441
    %v474 = vpack.c.b16 %v442, %v442
    %507 = vst [vmem:[#allocation2] sm:$0xf] %v443
    %508 = vst [vmem:[#allocation2 + $0x4] sm:$0xf] %v444
    %509 = vst [vmem:[#allocation2 + $0x8] sm:$0xf] %v445
    %510 = vst [vmem:[#allocation2 + $0xc] sm:$0xf] %v446
    %511 = vst [vmem:[#allocation2 + $0x10] sm:$0xf] %v447
    %512 = vst [vmem:[#allocation2 + $0x14] sm:$0xf] %v448
    %513 = vst [vmem:[#allocation2 + $0x18] sm:$0xf] %v449
    %514 = vst [vmem:[#allocation2 + $0x1c] sm:$0xf] %v450
    %515 = vst [vmem:[#allocation2 + $0x20] sm:$0xf] %v451
    %516 = vst [vmem:[#allocation2 + $0x24] sm:$0xf] %v452
    %517 = vst [vmem:[#allocation2 + $0x28] sm:$0xf] %v453
    %518 = vst [vmem:[#allocation2 + $0x2c] sm:$0xf] %v454
    %519 = vst [vmem:[#allocation2 + $0x30] sm:$0xf] %v455
    %520 = vst [vmem:[#allocation2 + $0x34] sm:$0xf] %v456
    %521 = vst [vmem:[#allocation2 + $0x38] sm:$0xf] %v457
    %522 = vst [vmem:[#allocation2 + $0x3c] sm:$0xf] %v458
    %523 = vst [vmem:[#allocation2 + $0x40] sm:$0xf] %v459
    %524 = vst [vmem:[#allocation2 + $0x44] sm:$0xf] %v460
    %525 = vst [vmem:[#allocation2 + $0x48] sm:$0xf] %v461
    %526 = vst [vmem:[#allocation2 + $0x4c] sm:$0xf] %v462
    %527 = vst [vmem:[#allocation2 + $0x50] sm:$0xf] %v463
    %528 = vst [vmem:[#allocation2 + $0x54] sm:$0xf] %v464
    %529 = vst [vmem:[#allocation2 + $0x58] sm:$0xf] %v465
    %530 = vst [vmem:[#allocation2 + $0x5c] sm:$0xf] %v466
    %531 = vst [vmem:[#allocation2 + $0x60] sm:$0xf] %v467
    %532 = vst [vmem:[#allocation2 + $0x64] sm:$0xf] %v468
    %533 = vst [vmem:[#allocation2 + $0x68] sm:$0xf] %v469
    %534 = vst [vmem:[#allocation2 + $0x6c] sm:$0xf] %v470
    %535 = vst [vmem:[#allocation2 + $0x70] sm:$0xf] %v471
    %536 = vst [vmem:[#allocation2 + $0x74] sm:$0xf] %v472
    %537 = vst [vmem:[#allocation2 + $0x78] sm:$0xf] %v473
    %538 = vst [vmem:[#allocation2 + $0x7c] sm:$0xf] %v474
    %v539 = vld [vmem:[%s2] sm:$0x1]
    %v540 = vld [vmem:[%s3] sm:$0x1]
    %v542 = vlaneseq
    %v543 = vshrl.u32 %v542, 7
    %v544 = vsub.s32 0, %v543
    %v545 = vrot.slane %v539, %v544
    %v547 = vmul.f32 %v221, %v545
    %v548 = vmul.f32 %v226, %v545
    %v549 = vmul.f32 %v231, %v545
    %v550 = vmul.f32 %v236, %v545
    %v551 = vmul.f32 %v241, %v545
    %v552 = vmul.f32 %v246, %v545
    %v553 = vmul.f32 %v251, %v545
    %v554 = vmul.f32 %v256, %v545
    %v555 = vmul.f32 %v261, %v545
    %v556 = vmul.f32 %v266, %v545
    %v557 = vmul.f32 %v271, %v545
    %v558 = vmul.f32 %v276, %v545
    %v559 = vmul.f32 %v281, %v545
    %v560 = vmul.f32 %v286, %v545
    %v561 = vmul.f32 %v291, %v545
    %v562 = vmul.f32 %v296, %v545
    %v563 = vmul.f32 %v301, %v545
    %v564 = vmul.f32 %v306, %v545
    %v565 = vmul.f32 %v311, %v545
    %v566 = vmul.f32 %v316, %v545
    %v567 = vmul.f32 %v321, %v545
    %v568 = vmul.f32 %v326, %v545
    %v569 = vmul.f32 %v331, %v545
    %v570 = vmul.f32 %v336, %v545
    %v571 = vmul.f32 %v341, %v545
    %v572 = vmul.f32 %v346, %v545
    %v573 = vmul.f32 %v351, %v545
    %v574 = vmul.f32 %v356, %v545
    %v575 = vmul.f32 %v361, %v545
    %v576 = vmul.f32 %v366, %v545
    %v577 = vmul.f32 %v371, %v545
    %v578 = vmul.f32 %v376, %v545
    %v579 = vsel %vm57, %v547, 0.0
    %580 = vadd.xlane.f32.xlu0 %v579
    %v581 = vpop.xlane.xlu0 %580
    %v582 = vsel %vm57, %v548, 0.0
    %583 = vadd.xlane.f32.xlu0 %v582
    %v584 = vpop.xlane.xlu0 %583
    %v585 = vsel %vm57, %v549, 0.0
    %586 = vadd.xlane.f32.xlu0 %v585
    %v587 = vpop.xlane.xlu0 %586
    %v588 = vsel %vm57, %v550, 0.0
    %589 = vadd.xlane.f32.xlu0 %v588
    %v590 = vpop.xlane.xlu0 %589
    %v591 = vsel %vm57, %v551, 0.0
    %592 = vadd.xlane.f32.xlu0 %v591
    %v593 = vpop.xlane.xlu0 %592
    %v594 = vsel %vm57, %v552, 0.0
    %595 = vadd.xlane.f32.xlu0 %v594
    %v596 = vpop.xlane.xlu0 %595
    %v597 = vsel %vm57, %v553, 0.0
    %598 = vadd.xlane.f32.xlu0 %v597
    %v599 = vpop.xlane.xlu0 %598
    %v600 = vsel %vm57, %v554, 0.0
    %601 = vadd.xlane.f32.xlu0 %v600
    %v602 = vpop.xlane.xlu0 %601
    %v603 = vsel %vm57, %v555, 0.0
    %604 = vadd.xlane.f32.xlu0 %v603
    %v605 = vpop.xlane.xlu0 %604
    %v606 = vsel %vm57, %v556, 0.0
    %607 = vadd.xlane.f32.xlu0 %v606
    %v608 = vpop.xlane.xlu0 %607
    %v609 = vsel %vm57, %v557, 0.0
    %610 = vadd.xlane.f32.xlu0 %v609
    %v611 = vpop.xlane.xlu0 %610
    %v612 = vsel %vm57, %v558, 0.0
    %613 = vadd.xlane.f32.xlu0 %v612
    %v614 = vpop.xlane.xlu0 %613
    %v615 = vsel %vm57, %v559, 0.0
    %616 = vadd.xlane.f32.xlu0 %v615
    %v617 = vpop.xlane.xlu0 %616
    %v618 = vsel %vm57, %v560, 0.0
    %619 = vadd.xlane.f32.xlu0 %v618
    %v620 = vpop.xlane.xlu0 %619
    %v621 = vsel %vm57, %v561, 0.0
    %622 = vadd.xlane.f32.xlu0 %v621
    %v623 = vpop.xlane.xlu0 %622
    %v624 = vsel %vm57, %v562, 0.0
    %625 = vadd.xlane.f32.xlu0 %v624
    %v626 = vpop.xlane.xlu0 %625
    %v627 = vsel %vm57, %v563, 0.0
    %628 = vadd.xlane.f32.xlu0 %v627
    %v629 = vpop.xlane.xlu0 %628
    %v630 = vsel %vm57, %v564, 0.0
    %631 = vadd.xlane.f32.xlu0 %v630
    %v632 = vpop.xlane.xlu0 %631
    %v633 = vsel %vm57, %v565, 0.0
    %634 = vadd.xlane.f32.xlu0 %v633
    %v635 = vpop.xlane.xlu0 %634
    %v636 = vsel %vm57, %v566, 0.0
    %637 = vadd.xlane.f32.xlu0 %v636
    %v638 = vpop.xlane.xlu0 %637
    %v639 = vsel %vm57, %v567, 0.0
    %640 = vadd.xlane.f32.xlu0 %v639
    %v641 = vpop.xlane.xlu0 %640
    %v642 = vsel %vm57, %v568, 0.0
    %643 = vadd.xlane.f32.xlu0 %v642
    %v644 = vpop.xlane.xlu0 %643
    %v645 = vsel %vm57, %v569, 0.0
    %646 = vadd.xlane.f32.xlu0 %v645
    %v647 = vpop.xlane.xlu0 %646
    %v648 = vsel %vm57, %v570, 0.0
    %649 = vadd.xlane.f32.xlu0 %v648
    %v650 = vpop.xlane.xlu0 %649
    %v651 = vsel %vm57, %v571, 0.0
    %652 = vadd.xlane.f32.xlu0 %v651
    %v653 = vpop.xlane.xlu0 %652
    %v654 = vsel %vm57, %v572, 0.0
    %655 = vadd.xlane.f32.xlu0 %v654
    %v656 = vpop.xlane.xlu0 %655
    %v657 = vsel %vm57, %v573, 0.0
    %658 = vadd.xlane.f32.xlu0 %v657
    %v659 = vpop.xlane.xlu0 %658
    %v660 = vsel %vm57, %v574, 0.0
    %661 = vadd.xlane.f32.xlu0 %v660
    %v662 = vpop.xlane.xlu0 %661
    %v663 = vsel %vm57, %v575, 0.0
    %664 = vadd.xlane.f32.xlu0 %v663
    %v665 = vpop.xlane.xlu0 %664
    %v666 = vsel %vm57, %v576, 0.0
    %667 = vadd.xlane.f32.xlu0 %v666
    %v668 = vpop.xlane.xlu0 %667
    %v669 = vsel %vm57, %v577, 0.0
    %670 = vadd.xlane.f32.xlu0 %v669
    %v671 = vpop.xlane.xlu0 %670
    %v672 = vsel %vm57, %v578, 0.0
    %673 = vadd.xlane.f32.xlu0 %v672
    %v674 = vpop.xlane.xlu0 %673
    %v676 = vlaneseq
    %v677 = vshrl.u32 %v676, 7
    %v678 = vsub.s32 0, %v677
    %v679 = vrot.slane %v540, %v678
    %v681 = vmul.f32 %v221, %v679
    %v682 = vmul.f32 %v226, %v679
    %v683 = vmul.f32 %v231, %v679
    %v684 = vmul.f32 %v236, %v679
    %v685 = vmul.f32 %v241, %v679
    %v686 = vmul.f32 %v246, %v679
    %v687 = vmul.f32 %v251, %v679
    %v688 = vmul.f32 %v256, %v679
    %v689 = vmul.f32 %v261, %v679
    %v690 = vmul.f32 %v266, %v679
    %v691 = vmul.f32 %v271, %v679
    %v692 = vmul.f32 %v276, %v679
    %v693 = vmul.f32 %v281, %v679
    %v694 = vmul.f32 %v286, %v679
    %v695 = vmul.f32 %v291, %v679
    %v696 = vmul.f32 %v296, %v679
    %v697 = vmul.f32 %v301, %v679
    %v698 = vmul.f32 %v306, %v679
    %v699 = vmul.f32 %v311, %v679
    %v700 = vmul.f32 %v316, %v679
    %v701 = vmul.f32 %v321, %v679
    %v702 = vmul.f32 %v326, %v679
    %v703 = vmul.f32 %v331, %v679
    %v704 = vmul.f32 %v336, %v679
    %v705 = vmul.f32 %v341, %v679
    %v706 = vmul.f32 %v346, %v679
    %v707 = vmul.f32 %v351, %v679
    %v708 = vmul.f32 %v356, %v679
    %v709 = vmul.f32 %v361, %v679
    %v710 = vmul.f32 %v366, %v679
    %v711 = vmul.f32 %v371, %v679
    %v712 = vmul.f32 %v376, %v679
    %v713 = vsel %vm57, %v681, 0.0
    %714 = vadd.xlane.f32.xlu0 %v713
    %v715 = vpop.xlane.xlu0 %714
    %v716 = vsel %vm57, %v682, 0.0
    %717 = vadd.xlane.f32.xlu0 %v716
    %v718 = vpop.xlane.xlu0 %717
    %v719 = vsel %vm57, %v683, 0.0
    %720 = vadd.xlane.f32.xlu0 %v719
    %v721 = vpop.xlane.xlu0 %720
    %v722 = vsel %vm57, %v684, 0.0
    %723 = vadd.xlane.f32.xlu0 %v722
    %v724 = vpop.xlane.xlu0 %723
    %v725 = vsel %vm57, %v685, 0.0
    %726 = vadd.xlane.f32.xlu0 %v725
    %v727 = vpop.xlane.xlu0 %726
    %v728 = vsel %vm57, %v686, 0.0
    %729 = vadd.xlane.f32.xlu0 %v728
    %v730 = vpop.xlane.xlu0 %729
    %v731 = vsel %vm57, %v687, 0.0
    %732 = vadd.xlane.f32.xlu0 %v731
    %v733 = vpop.xlane.xlu0 %732
    %v734 = vsel %vm57, %v688, 0.0
    %735 = vadd.xlane.f32.xlu0 %v734
    %v736 = vpop.xlane.xlu0 %735
    %v737 = vsel %vm57, %v689, 0.0
    %738 = vadd.xlane.f32.xlu0 %v737
    %v739 = vpop.xlane.xlu0 %738
    %v740 = vsel %vm57, %v690, 0.0
    %741 = vadd.xlane.f32.xlu0 %v740
    %v742 = vpop.xlane.xlu0 %741
    %v743 = vsel %vm57, %v691, 0.0
    %744 = vadd.xlane.f32.xlu0 %v743
    %v745 = vpop.xlane.xlu0 %744
    %v746 = vsel %vm57, %v692, 0.0
    %747 = vadd.xlane.f32.xlu0 %v746
    %v748 = vpop.xlane.xlu0 %747
    %v749 = vsel %vm57, %v693, 0.0
    %750 = vadd.xlane.f32.xlu0 %v749
    %v751 = vpop.xlane.xlu0 %750
    %v752 = vsel %vm57, %v694, 0.0
    %753 = vadd.xlane.f32.xlu0 %v752
    %v754 = vpop.xlane.xlu0 %753
    %v755 = vsel %vm57, %v695, 0.0
    %756 = vadd.xlane.f32.xlu0 %v755
    %v757 = vpop.xlane.xlu0 %756
    %v758 = vsel %vm57, %v696, 0.0
    %759 = vadd.xlane.f32.xlu0 %v758
    %v760 = vpop.xlane.xlu0 %759
    %v761 = vsel %vm57, %v697, 0.0
    %762 = vadd.xlane.f32.xlu0 %v761
    %v763 = vpop.xlane.xlu0 %762
    %v764 = vsel %vm57, %v698, 0.0
    %765 = vadd.xlane.f32.xlu0 %v764
    %v766 = vpop.xlane.xlu0 %765
    %v767 = vsel %vm57, %v699, 0.0
    %768 = vadd.xlane.f32.xlu0 %v767
    %v769 = vpop.xlane.xlu0 %768
    %v770 = vsel %vm57, %v700, 0.0
    %771 = vadd.xlane.f32.xlu0 %v770
    %v772 = vpop.xlane.xlu0 %771
    %v773 = vsel %vm57, %v701, 0.0
    %774 = vadd.xlane.f32.xlu0 %v773
    %v775 = vpop.xlane.xlu0 %774
    %v776 = vsel %vm57, %v702, 0.0
    %777 = vadd.xlane.f32.xlu0 %v776
    %v778 = vpop.xlane.xlu0 %777
    %v779 = vsel %vm57, %v703, 0.0
    %780 = vadd.xlane.f32.xlu0 %v779
    %v781 = vpop.xlane.xlu0 %780
    %v782 = vsel %vm57, %v704, 0.0
    %783 = vadd.xlane.f32.xlu0 %v782
    %v784 = vpop.xlane.xlu0 %783
    %v785 = vsel %vm57, %v705, 0.0
    %786 = vadd.xlane.f32.xlu0 %v785
    %v787 = vpop.xlane.xlu0 %786
    %v788 = vsel %vm57, %v706, 0.0
    %789 = vadd.xlane.f32.xlu0 %v788
    %v790 = vpop.xlane.xlu0 %789
    %v791 = vsel %vm57, %v707, 0.0
    %792 = vadd.xlane.f32.xlu0 %v791
    %v793 = vpop.xlane.xlu0 %792
    %v794 = vsel %vm57, %v708, 0.0
    %795 = vadd.xlane.f32.xlu0 %v794
    %v796 = vpop.xlane.xlu0 %795
    %v797 = vsel %vm57, %v709, 0.0
    %798 = vadd.xlane.f32.xlu0 %v797
    %v799 = vpop.xlane.xlu0 %798
    %v800 = vsel %vm57, %v710, 0.0
    %801 = vadd.xlane.f32.xlu0 %v800
    %v802 = vpop.xlane.xlu0 %801
    %v803 = vsel %vm57, %v711, 0.0
    %804 = vadd.xlane.f32.xlu0 %v803
    %v805 = vpop.xlane.xlu0 %804
    %v806 = vsel %vm57, %v712, 0.0
    %807 = vadd.xlane.f32.xlu0 %v806
    %v808 = vpop.xlane.xlu0 %807
    %841 = vrot.lane.b32.xlu0 %v547, 96
    %v842 = vpop.permute.xlu0 %841
    %843 = vrot.lane.b32.xlu0 %v548, 96
    %v844 = vpop.permute.xlu0 %843
    %845 = vrot.lane.b32.xlu0 %v549, 96
    %v846 = vpop.permute.xlu0 %845
    %847 = vrot.lane.b32.xlu0 %v550, 96
    %v848 = vpop.permute.xlu0 %847
    %849 = vrot.lane.b32.xlu0 %v551, 96
    %v850 = vpop.permute.xlu0 %849
    %851 = vrot.lane.b32.xlu0 %v552, 96
    %v852 = vpop.permute.xlu0 %851
    %853 = vrot.lane.b32.xlu0 %v553, 96
    %v854 = vpop.permute.xlu0 %853
    %855 = vrot.lane.b32.xlu0 %v554, 96
    %v856 = vpop.permute.xlu0 %855
    %857 = vrot.lane.b32.xlu0 %v555, 96
    %v858 = vpop.permute.xlu0 %857
    %859 = vrot.lane.b32.xlu0 %v556, 96
    %v860 = vpop.permute.xlu0 %859
    %861 = vrot.lane.b32.xlu0 %v557, 96
    %v862 = vpop.permute.xlu0 %861
    %863 = vrot.lane.b32.xlu0 %v558, 96
    %v864 = vpop.permute.xlu0 %863
    %865 = vrot.lane.b32.xlu0 %v559, 96
    %v866 = vpop.permute.xlu0 %865
    %867 = vrot.lane.b32.xlu0 %v560, 96
    %v868 = vpop.permute.xlu0 %867
    %869 = vrot.lane.b32.xlu0 %v561, 96
    %v870 = vpop.permute.xlu0 %869
    %871 = vrot.lane.b32.xlu0 %v562, 96
    %v872 = vpop.permute.xlu0 %871
    %873 = vrot.lane.b32.xlu0 %v563, 96
    %v874 = vpop.permute.xlu0 %873
    %875 = vrot.lane.b32.xlu0 %v564, 96
    %v876 = vpop.permute.xlu0 %875
    %877 = vrot.lane.b32.xlu0 %v565, 96
    %v878 = vpop.permute.xlu0 %877
    %879 = vrot.lane.b32.xlu0 %v566, 96
    %v880 = vpop.permute.xlu0 %879
    %881 = vrot.lane.b32.xlu0 %v567, 96
    %v882 = vpop.permute.xlu0 %881
    %883 = vrot.lane.b32.xlu0 %v568, 96
    %v884 = vpop.permute.xlu0 %883
    %885 = vrot.lane.b32.xlu0 %v569, 96
    %v886 = vpop.permute.xlu0 %885
    %887 = vrot.lane.b32.xlu0 %v570, 96
    %v888 = vpop.permute.xlu0 %887
    %889 = vrot.lane.b32.xlu0 %v571, 96
    %v890 = vpop.permute.xlu0 %889
    %891 = vrot.lane.b32.xlu0 %v572, 96
    %v892 = vpop.permute.xlu0 %891
    %893 = vrot.lane.b32.xlu0 %v573, 96
    %v894 = vpop.permute.xlu0 %893
    %895 = vrot.lane.b32.xlu0 %v574, 96
    %v896 = vpop.permute.xlu0 %895
    %897 = vrot.lane.b32.xlu0 %v575, 96
    %v898 = vpop.permute.xlu0 %897
    %899 = vrot.lane.b32.xlu0 %v576, 96
    %v900 = vpop.permute.xlu0 %899
    %901 = vrot.lane.b32.xlu0 %v577, 96
    %v902 = vpop.permute.xlu0 %901
    %903 = vrot.lane.b32.xlu0 %v578, 96
    %v904 = vpop.permute.xlu0 %903
    %v937 = vsel %vm57, %v842, 0.0
    %938 = vadd.xlane.f32.xlu0 %v937
    %v939 = vpop.xlane.xlu0 %938
    %v940 = vsel %vm57, %v844, 0.0
    %941 = vadd.xlane.f32.xlu0 %v940
    %v942 = vpop.xlane.xlu0 %941
    %v943 = vsel %vm57, %v846, 0.0
    %944 = vadd.xlane.f32.xlu0 %v943
    %v945 = vpop.xlane.xlu0 %944
    %v946 = vsel %vm57, %v848, 0.0
    %947 = vadd.xlane.f32.xlu0 %v946
    %v948 = vpop.xlane.xlu0 %947
    %v949 = vsel %vm57, %v850, 0.0
    %950 = vadd.xlane.f32.xlu0 %v949
    %v951 = vpop.xlane.xlu0 %950
    %v952 = vsel %vm57, %v852, 0.0
    %953 = vadd.xlane.f32.xlu0 %v952
    %v954 = vpop.xlane.xlu0 %953
    %v955 = vsel %vm57, %v854, 0.0
    %956 = vadd.xlane.f32.xlu0 %v955
    %v957 = vpop.xlane.xlu0 %956
    %v958 = vsel %vm57, %v856, 0.0
    %959 = vadd.xlane.f32.xlu0 %v958
    %v960 = vpop.xlane.xlu0 %959
    %v961 = vsel %vm57, %v858, 0.0
    %962 = vadd.xlane.f32.xlu0 %v961
    %v963 = vpop.xlane.xlu0 %962
    %v964 = vsel %vm57, %v860, 0.0
    %965 = vadd.xlane.f32.xlu0 %v964
    %v966 = vpop.xlane.xlu0 %965
    %v967 = vsel %vm57, %v862, 0.0
    %968 = vadd.xlane.f32.xlu0 %v967
    %v969 = vpop.xlane.xlu0 %968
    %v970 = vsel %vm57, %v864, 0.0
    %971 = vadd.xlane.f32.xlu0 %v970
    %v972 = vpop.xlane.xlu0 %971
    %v973 = vsel %vm57, %v866, 0.0
    %974 = vadd.xlane.f32.xlu0 %v973
    %v975 = vpop.xlane.xlu0 %974
    %v976 = vsel %vm57, %v868, 0.0
    %977 = vadd.xlane.f32.xlu0 %v976
    %v978 = vpop.xlane.xlu0 %977
    %v979 = vsel %vm57, %v870, 0.0
    %980 = vadd.xlane.f32.xlu0 %v979
    %v981 = vpop.xlane.xlu0 %980
    %v982 = vsel %vm57, %v872, 0.0
    %983 = vadd.xlane.f32.xlu0 %v982
    %v984 = vpop.xlane.xlu0 %983
    %v985 = vsel %vm57, %v874, 0.0
    %986 = vadd.xlane.f32.xlu0 %v985
    %v987 = vpop.xlane.xlu0 %986
    %v988 = vsel %vm57, %v876, 0.0
    %989 = vadd.xlane.f32.xlu0 %v988
    %v990 = vpop.xlane.xlu0 %989
    %v991 = vsel %vm57, %v878, 0.0
    %992 = vadd.xlane.f32.xlu0 %v991
    %v993 = vpop.xlane.xlu0 %992
    %v994 = vsel %vm57, %v880, 0.0
    %995 = vadd.xlane.f32.xlu0 %v994
    %v996 = vpop.xlane.xlu0 %995
    %v997 = vsel %vm57, %v882, 0.0
    %998 = vadd.xlane.f32.xlu0 %v997
    %v999 = vpop.xlane.xlu0 %998
    %v1000 = vsel %vm57, %v884, 0.0
    %1001 = vadd.xlane.f32.xlu0 %v1000
    %v1002 = vpop.xlane.xlu0 %1001
    %v1003 = vsel %vm57, %v886, 0.0
    %1004 = vadd.xlane.f32.xlu0 %v1003
    %v1005 = vpop.xlane.xlu0 %1004
    %v1006 = vsel %vm57, %v888, 0.0
    %1007 = vadd.xlane.f32.xlu0 %v1006
    %v1008 = vpop.xlane.xlu0 %1007
    %v1009 = vsel %vm57, %v890, 0.0
    %1010 = vadd.xlane.f32.xlu0 %v1009
    %v1011 = vpop.xlane.xlu0 %1010
    %v1012 = vsel %vm57, %v892, 0.0
    %1013 = vadd.xlane.f32.xlu0 %v1012
    %v1014 = vpop.xlane.xlu0 %1013
    %v1015 = vsel %vm57, %v894, 0.0
    %1016 = vadd.xlane.f32.xlu0 %v1015
    %v1017 = vpop.xlane.xlu0 %1016
    %v1018 = vsel %vm57, %v896, 0.0
    %1019 = vadd.xlane.f32.xlu0 %v1018
    %v1020 = vpop.xlane.xlu0 %1019
    %v1021 = vsel %vm57, %v898, 0.0
    %1022 = vadd.xlane.f32.xlu0 %v1021
    %v1023 = vpop.xlane.xlu0 %1022
    %v1024 = vsel %vm57, %v900, 0.0
    %1025 = vadd.xlane.f32.xlu0 %v1024
    %v1026 = vpop.xlane.xlu0 %1025
    %v1027 = vsel %vm57, %v902, 0.0
    %1028 = vadd.xlane.f32.xlu0 %v1027
    %v1029 = vpop.xlane.xlu0 %1028
    %v1030 = vsel %vm57, %v904, 0.0
    %1031 = vadd.xlane.f32.xlu0 %v1030
    %v1032 = vpop.xlane.xlu0 %1031
    %1065 = vrot.lane.b32.xlu0 %v681, 96
    %v1066 = vpop.permute.xlu0 %1065
    %1067 = vrot.lane.b32.xlu0 %v682, 96
    %v1068 = vpop.permute.xlu0 %1067
    %1069 = vrot.lane.b32.xlu0 %v683, 96
    %v1070 = vpop.permute.xlu0 %1069
    %1071 = vrot.lane.b32.xlu0 %v684, 96
    %v1072 = vpop.permute.xlu0 %1071
    %1073 = vrot.lane.b32.xlu0 %v685, 96
    %v1074 = vpop.permute.xlu0 %1073
    %1075 = vrot.lane.b32.xlu0 %v686, 96
    %v1076 = vpop.permute.xlu0 %1075
    %1077 = vrot.lane.b32.xlu0 %v687, 96
    %v1078 = vpop.permute.xlu0 %1077
    %1079 = vrot.lane.b32.xlu0 %v688, 96
    %v1080 = vpop.permute.xlu0 %1079
    %1081 = vrot.lane.b32.xlu0 %v689, 96
    %v1082 = vpop.permute.xlu0 %1081
    %1083 = vrot.lane.b32.xlu0 %v690, 96
    %v1084 = vpop.permute.xlu0 %1083
    %1085 = vrot.lane.b32.xlu0 %v691, 96
    %v1086 = vpop.permute.xlu0 %1085
    %1087 = vrot.lane.b32.xlu0 %v692, 96
    %v1088 = vpop.permute.xlu0 %1087
    %1089 = vrot.lane.b32.xlu0 %v693, 96
    %v1090 = vpop.permute.xlu0 %1089
    %1091 = vrot.lane.b32.xlu0 %v694, 96
    %v1092 = vpop.permute.xlu0 %1091
    %1093 = vrot.lane.b32.xlu0 %v695, 96
    %v1094 = vpop.permute.xlu0 %1093
    %1095 = vrot.lane.b32.xlu0 %v696, 96
    %v1096 = vpop.permute.xlu0 %1095
    %1097 = vrot.lane.b32.xlu0 %v697, 96
    %v1098 = vpop.permute.xlu0 %1097
    %1099 = vrot.lane.b32.xlu0 %v698, 96
    %v1100 = vpop.permute.xlu0 %1099
    %1101 = vrot.lane.b32.xlu0 %v699, 96
    %v1102 = vpop.permute.xlu0 %1101
    %1103 = vrot.lane.b32.xlu0 %v700, 96
    %v1104 = vpop.permute.xlu0 %1103
    %1105 = vrot.lane.b32.xlu0 %v701, 96
    %v1106 = vpop.permute.xlu0 %1105
    %1107 = vrot.lane.b32.xlu0 %v702, 96
    %v1108 = vpop.permute.xlu0 %1107
    %1109 = vrot.lane.b32.xlu0 %v703, 96
    %v1110 = vpop.permute.xlu0 %1109
    %1111 = vrot.lane.b32.xlu0 %v704, 96
    %v1112 = vpop.permute.xlu0 %1111
    %1113 = vrot.lane.b32.xlu0 %v705, 96
    %v1114 = vpop.permute.xlu0 %1113
    %1115 = vrot.lane.b32.xlu0 %v706, 96
    %v1116 = vpop.permute.xlu0 %1115
    %1117 = vrot.lane.b32.xlu0 %v707, 96
    %v1118 = vpop.permute.xlu0 %1117
    %1119 = vrot.lane.b32.xlu0 %v708, 96
    %v1120 = vpop.permute.xlu0 %1119
    %1121 = vrot.lane.b32.xlu0 %v709, 96
    %v1122 = vpop.permute.xlu0 %1121
    %1123 = vrot.lane.b32.xlu0 %v710, 96
    %v1124 = vpop.permute.xlu0 %1123
    %1125 = vrot.lane.b32.xlu0 %v711, 96
    %v1126 = vpop.permute.xlu0 %1125
    %1127 = vrot.lane.b32.xlu0 %v712, 96
    %v1128 = vpop.permute.xlu0 %1127
    %v1161 = vsel %vm57, %v1066, 0.0
    %1162 = vadd.xlane.f32.xlu0 %v1161
    %v1163 = vpop.xlane.xlu0 %1162
    %v1164 = vsel %vm57, %v1068, 0.0
    %1165 = vadd.xlane.f32.xlu0 %v1164
    %v1166 = vpop.xlane.xlu0 %1165
    %v1167 = vsel %vm57, %v1070, 0.0
    %1168 = vadd.xlane.f32.xlu0 %v1167
    %v1169 = vpop.xlane.xlu0 %1168
    %v1170 = vsel %vm57, %v1072, 0.0
    %1171 = vadd.xlane.f32.xlu0 %v1170
    %v1172 = vpop.xlane.xlu0 %1171
    %v1173 = vsel %vm57, %v1074, 0.0
    %1174 = vadd.xlane.f32.xlu0 %v1173
    %v1175 = vpop.xlane.xlu0 %1174
    %v1176 = vsel %vm57, %v1076, 0.0
    %1177 = vadd.xlane.f32.xlu0 %v1176
    %v1178 = vpop.xlane.xlu0 %1177
    %v1179 = vsel %vm57, %v1078, 0.0
    %1180 = vadd.xlane.f32.xlu0 %v1179
    %v1181 = vpop.xlane.xlu0 %1180
    %v1182 = vsel %vm57, %v1080, 0.0
    %1183 = vadd.xlane.f32.xlu0 %v1182
    %v1184 = vpop.xlane.xlu0 %1183
    %v1185 = vsel %vm57, %v1082, 0.0
    %1186 = vadd.xlane.f32.xlu0 %v1185
    %v1187 = vpop.xlane.xlu0 %1186
    %v1188 = vsel %vm57, %v1084, 0.0
    %1189 = vadd.xlane.f32.xlu0 %v1188
    %v1190 = vpop.xlane.xlu0 %1189
    %v1191 = vsel %vm57, %v1086, 0.0
    %1192 = vadd.xlane.f32.xlu0 %v1191
    %v1193 = vpop.xlane.xlu0 %1192
    %v1194 = vsel %vm57, %v1088, 0.0
    %1195 = vadd.xlane.f32.xlu0 %v1194
    %v1196 = vpop.xlane.xlu0 %1195
    %v1197 = vsel %vm57, %v1090, 0.0
    %1198 = vadd.xlane.f32.xlu0 %v1197
    %v1199 = vpop.xlane.xlu0 %1198
    %v1200 = vsel %vm57, %v1092, 0.0
    %1201 = vadd.xlane.f32.xlu0 %v1200
    %v1202 = vpop.xlane.xlu0 %1201
    %v1203 = vsel %vm57, %v1094, 0.0
    %1204 = vadd.xlane.f32.xlu0 %v1203
    %v1205 = vpop.xlane.xlu0 %1204
    %v1206 = vsel %vm57, %v1096, 0.0
    %1207 = vadd.xlane.f32.xlu0 %v1206
    %v1208 = vpop.xlane.xlu0 %1207
    %v1209 = vsel %vm57, %v1098, 0.0
    %1210 = vadd.xlane.f32.xlu0 %v1209
    %v1211 = vpop.xlane.xlu0 %1210
    %v1212 = vsel %vm57, %v1100, 0.0
    %1213 = vadd.xlane.f32.xlu0 %v1212
    %v1214 = vpop.xlane.xlu0 %1213
    %v1215 = vsel %vm57, %v1102, 0.0
    %1216 = vadd.xlane.f32.xlu0 %v1215
    %v1217 = vpop.xlane.xlu0 %1216
    %v1218 = vsel %vm57, %v1104, 0.0
    %1219 = vadd.xlane.f32.xlu0 %v1218
    %v1220 = vpop.xlane.xlu0 %1219
    %v1221 = vsel %vm57, %v1106, 0.0
    %1222 = vadd.xlane.f32.xlu0 %v1221
    %v1223 = vpop.xlane.xlu0 %1222
    %v1224 = vsel %vm57, %v1108, 0.0
    %1225 = vadd.xlane.f32.xlu0 %v1224
    %v1226 = vpop.xlane.xlu0 %1225
    %v1227 = vsel %vm57, %v1110, 0.0
    %1228 = vadd.xlane.f32.xlu0 %v1227
    %v1229 = vpop.xlane.xlu0 %1228
    %v1230 = vsel %vm57, %v1112, 0.0
    %1231 = vadd.xlane.f32.xlu0 %v1230
    %v1232 = vpop.xlane.xlu0 %1231
    %v1233 = vsel %vm57, %v1114, 0.0
    %1234 = vadd.xlane.f32.xlu0 %v1233
    %v1235 = vpop.xlane.xlu0 %1234
    %v1236 = vsel %vm57, %v1116, 0.0
    %1237 = vadd.xlane.f32.xlu0 %v1236
    %v1238 = vpop.xlane.xlu0 %1237
    %v1239 = vsel %vm57, %v1118, 0.0
    %1240 = vadd.xlane.f32.xlu0 %v1239
    %v1241 = vpop.xlane.xlu0 %1240
    %v1242 = vsel %vm57, %v1120, 0.0
    %1243 = vadd.xlane.f32.xlu0 %v1242
    %v1244 = vpop.xlane.xlu0 %1243
    %v1245 = vsel %vm57, %v1122, 0.0
    %1246 = vadd.xlane.f32.xlu0 %v1245
    %v1247 = vpop.xlane.xlu0 %1246
    %v1248 = vsel %vm57, %v1124, 0.0
    %1249 = vadd.xlane.f32.xlu0 %v1248
    %v1250 = vpop.xlane.xlu0 %1249
    %v1251 = vsel %vm57, %v1126, 0.0
    %1252 = vadd.xlane.f32.xlu0 %v1251
    %v1253 = vpop.xlane.xlu0 %1252
    %v1254 = vsel %vm57, %v1128, 0.0
    %1255 = vadd.xlane.f32.xlu0 %v1254
    %v1256 = vpop.xlane.xlu0 %1255
    %1257 = vrot.lane.b32.xlu0 %v547, 64
    %v1258 = vpop.permute.xlu0 %1257
    %1259 = vrot.lane.b32.xlu0 %v548, 64
    %v1260 = vpop.permute.xlu0 %1259
    %1261 = vrot.lane.b32.xlu0 %v549, 64
    %v1262 = vpop.permute.xlu0 %1261
    %1263 = vrot.lane.b32.xlu0 %v550, 64
    %v1264 = vpop.permute.xlu0 %1263
    %1265 = vrot.lane.b32.xlu0 %v551, 64
    %v1266 = vpop.permute.xlu0 %1265
    %1267 = vrot.lane.b32.xlu0 %v552, 64
    %v1268 = vpop.permute.xlu0 %1267
    %1269 = vrot.lane.b32.xlu0 %v553, 64
    %v1270 = vpop.permute.xlu0 %1269
    %1271 = vrot.lane.b32.xlu0 %v554, 64
    %v1272 = vpop.permute.xlu0 %1271
    %1273 = vrot.lane.b32.xlu0 %v555, 64
    %v1274 = vpop.permute.xlu0 %1273
    %1275 = vrot.lane.b32.xlu0 %v556, 64
    %v1276 = vpop.permute.xlu0 %1275
    %1277 = vrot.lane.b32.xlu0 %v557, 64
    %v1278 = vpop.permute.xlu0 %1277
    %1279 = vrot.lane.b32.xlu0 %v558, 64
    %v1280 = vpop.permute.xlu0 %1279
    %1281 = vrot.lane.b32.xlu0 %v559, 64
    %v1282 = vpop.permute.xlu0 %1281
    %1283 = vrot.lane.b32.xlu0 %v560, 64
    %v1284 = vpop.permute.xlu0 %1283
    %1285 = vrot.lane.b32.xlu0 %v561, 64
    %v1286 = vpop.permute.xlu0 %1285
    %1287 = vrot.lane.b32.xlu0 %v562, 64
    %v1288 = vpop.permute.xlu0 %1287
    %1289 = vrot.lane.b32.xlu0 %v563, 64
    %v1290 = vpop.permute.xlu0 %1289
    %1291 = vrot.lane.b32.xlu0 %v564, 64
    %v1292 = vpop.permute.xlu0 %1291
    %1293 = vrot.lane.b32.xlu0 %v565, 64
    %v1294 = vpop.permute.xlu0 %1293
    %1295 = vrot.lane.b32.xlu0 %v566, 64
    %v1296 = vpop.permute.xlu0 %1295
    %1297 = vrot.lane.b32.xlu0 %v567, 64
    %v1298 = vpop.permute.xlu0 %1297
    %1299 = vrot.lane.b32.xlu0 %v568, 64
    %v1300 = vpop.permute.xlu0 %1299
    %1301 = vrot.lane.b32.xlu0 %v569, 64
    %v1302 = vpop.permute.xlu0 %1301
    %1303 = vrot.lane.b32.xlu0 %v570, 64
    %v1304 = vpop.permute.xlu0 %1303
    %1305 = vrot.lane.b32.xlu0 %v571, 64
    %v1306 = vpop.permute.xlu0 %1305
    %1307 = vrot.lane.b32.xlu0 %v572, 64
    %v1308 = vpop.permute.xlu0 %1307
    %1309 = vrot.lane.b32.xlu0 %v573, 64
    %v1310 = vpop.permute.xlu0 %1309
    %1311 = vrot.lane.b32.xlu0 %v574, 64
    %v1312 = vpop.permute.xlu0 %1311
    %1313 = vrot.lane.b32.xlu0 %v575, 64
    %v1314 = vpop.permute.xlu0 %1313
    %1315 = vrot.lane.b32.xlu0 %v576, 64
    %v1316 = vpop.permute.xlu0 %1315
    %1317 = vrot.lane.b32.xlu0 %v577, 64
    %v1318 = vpop.permute.xlu0 %1317
    %1319 = vrot.lane.b32.xlu0 %v578, 64
    %v1320 = vpop.permute.xlu0 %1319
    %v1353 = vsel %vm57, %v1258, 0.0
    %1354 = vadd.xlane.f32.xlu0 %v1353
    %v1355 = vpop.xlane.xlu0 %1354
    %v1356 = vsel %vm57, %v1260, 0.0
    %1357 = vadd.xlane.f32.xlu0 %v1356
    %v1358 = vpop.xlane.xlu0 %1357
    %v1359 = vsel %vm57, %v1262, 0.0
    %1360 = vadd.xlane.f32.xlu0 %v1359
    %v1361 = vpop.xlane.xlu0 %1360
    %v1362 = vsel %vm57, %v1264, 0.0
    %1363 = vadd.xlane.f32.xlu0 %v1362
    %v1364 = vpop.xlane.xlu0 %1363
    %v1365 = vsel %vm57, %v1266, 0.0
    %1366 = vadd.xlane.f32.xlu0 %v1365
    %v1367 = vpop.xlane.xlu0 %1366
    %v1368 = vsel %vm57, %v1268, 0.0
    %1369 = vadd.xlane.f32.xlu0 %v1368
    %v1370 = vpop.xlane.xlu0 %1369
    %v1371 = vsel %vm57, %v1270, 0.0
    %1372 = vadd.xlane.f32.xlu0 %v1371
    %v1373 = vpop.xlane.xlu0 %1372
    %v1374 = vsel %vm57, %v1272, 0.0
    %1375 = vadd.xlane.f32.xlu0 %v1374
    %v1376 = vpop.xlane.xlu0 %1375
    %v1377 = vsel %vm57, %v1274, 0.0
    %1378 = vadd.xlane.f32.xlu0 %v1377
    %v1379 = vpop.xlane.xlu0 %1378
    %v1380 = vsel %vm57, %v1276, 0.0
    %1381 = vadd.xlane.f32.xlu0 %v1380
    %v1382 = vpop.xlane.xlu0 %1381
    %v1383 = vsel %vm57, %v1278, 0.0
    %1384 = vadd.xlane.f32.xlu0 %v1383
    %v1385 = vpop.xlane.xlu0 %1384
    %v1386 = vsel %vm57, %v1280, 0.0
    %1387 = vadd.xlane.f32.xlu0 %v1386
    %v1388 = vpop.xlane.xlu0 %1387
    %v1389 = vsel %vm57, %v1282, 0.0
    %1390 = vadd.xlane.f32.xlu0 %v1389
    %v1391 = vpop.xlane.xlu0 %1390
    %v1392 = vsel %vm57, %v1284, 0.0
    %1393 = vadd.xlane.f32.xlu0 %v1392
    %v1394 = vpop.xlane.xlu0 %1393
    %v1395 = vsel %vm57, %v1286, 0.0
    %1396 = vadd.xlane.f32.xlu0 %v1395
    %v1397 = vpop.xlane.xlu0 %1396
    %v1398 = vsel %vm57, %v1288, 0.0
    %1399 = vadd.xlane.f32.xlu0 %v1398
    %v1400 = vpop.xlane.xlu0 %1399
    %v1401 = vsel %vm57, %v1290, 0.0
    %1402 = vadd.xlane.f32.xlu0 %v1401
    %v1403 = vpop.xlane.xlu0 %1402
    %v1404 = vsel %vm57, %v1292, 0.0
    %1405 = vadd.xlane.f32.xlu0 %v1404
    %v1406 = vpop.xlane.xlu0 %1405
    %v1407 = vsel %vm57, %v1294, 0.0
    %1408 = vadd.xlane.f32.xlu0 %v1407
    %v1409 = vpop.xlane.xlu0 %1408
    %v1410 = vsel %vm57, %v1296, 0.0
    %1411 = vadd.xlane.f32.xlu0 %v1410
    %v1412 = vpop.xlane.xlu0 %1411
    %v1413 = vsel %vm57, %v1298, 0.0
    %1414 = vadd.xlane.f32.xlu0 %v1413
    %v1415 = vpop.xlane.xlu0 %1414
    %v1416 = vsel %vm57, %v1300, 0.0
    %1417 = vadd.xlane.f32.xlu0 %v1416
    %v1418 = vpop.xlane.xlu0 %1417
    %v1419 = vsel %vm57, %v1302, 0.0
    %1420 = vadd.xlane.f32.xlu0 %v1419
    %v1421 = vpop.xlane.xlu0 %1420
    %v1422 = vsel %vm57, %v1304, 0.0
    %1423 = vadd.xlane.f32.xlu0 %v1422
    %v1424 = vpop.xlane.xlu0 %1423
    %v1425 = vsel %vm57, %v1306, 0.0
    %1426 = vadd.xlane.f32.xlu0 %v1425
    %v1427 = vpop.xlane.xlu0 %1426
    %v1428 = vsel %vm57, %v1308, 0.0
    %1429 = vadd.xlane.f32.xlu0 %v1428
    %v1430 = vpop.xlane.xlu0 %1429
    %v1431 = vsel %vm57, %v1310, 0.0
    %1432 = vadd.xlane.f32.xlu0 %v1431
    %v1433 = vpop.xlane.xlu0 %1432
    %v1434 = vsel %vm57, %v1312, 0.0
    %1435 = vadd.xlane.f32.xlu0 %v1434
    %v1436 = vpop.xlane.xlu0 %1435
    %v1437 = vsel %vm57, %v1314, 0.0
    %1438 = vadd.xlane.f32.xlu0 %v1437
    %v1439 = vpop.xlane.xlu0 %1438
    %v1440 = vsel %vm57, %v1316, 0.0
    %1441 = vadd.xlane.f32.xlu0 %v1440
    %v1442 = vpop.xlane.xlu0 %1441
    %v1443 = vsel %vm57, %v1318, 0.0
    %1444 = vadd.xlane.f32.xlu0 %v1443
    %v1445 = vpop.xlane.xlu0 %1444
    %v1446 = vsel %vm57, %v1320, 0.0
    %1447 = vadd.xlane.f32.xlu0 %v1446
    %v1448 = vpop.xlane.xlu0 %1447
    %1449 = vrot.lane.b32.xlu0 %v681, 64
    %v1450 = vpop.permute.xlu0 %1449
    %1451 = vrot.lane.b32.xlu0 %v682, 64
    %v1452 = vpop.permute.xlu0 %1451
    %1453 = vrot.lane.b32.xlu0 %v683, 64
    %v1454 = vpop.permute.xlu0 %1453
    %1455 = vrot.lane.b32.xlu0 %v684, 64
    %v1456 = vpop.permute.xlu0 %1455
    %1457 = vrot.lane.b32.xlu0 %v685, 64
    %v1458 = vpop.permute.xlu0 %1457
    %1459 = vrot.lane.b32.xlu0 %v686, 64
    %v1460 = vpop.permute.xlu0 %1459
    %1461 = vrot.lane.b32.xlu0 %v687, 64
    %v1462 = vpop.permute.xlu0 %1461
    %1463 = vrot.lane.b32.xlu0 %v688, 64
    %v1464 = vpop.permute.xlu0 %1463
    %1465 = vrot.lane.b32.xlu0 %v689, 64
    %v1466 = vpop.permute.xlu0 %1465
    %1467 = vrot.lane.b32.xlu0 %v690, 64
    %v1468 = vpop.permute.xlu0 %1467
    %1469 = vrot.lane.b32.xlu0 %v691, 64
    %v1470 = vpop.permute.xlu0 %1469
    %1471 = vrot.lane.b32.xlu0 %v692, 64
    %v1472 = vpop.permute.xlu0 %1471
    %1473 = vrot.lane.b32.xlu0 %v693, 64
    %v1474 = vpop.permute.xlu0 %1473
    %1475 = vrot.lane.b32.xlu0 %v694, 64
    %v1476 = vpop.permute.xlu0 %1475
    %1477 = vrot.lane.b32.xlu0 %v695, 64
    %v1478 = vpop.permute.xlu0 %1477
    %1479 = vrot.lane.b32.xlu0 %v696, 64
    %v1480 = vpop.permute.xlu0 %1479
    %1481 = vrot.lane.b32.xlu0 %v697, 64
    %v1482 = vpop.permute.xlu0 %1481
    %1483 = vrot.lane.b32.xlu0 %v698, 64
    %v1484 = vpop.permute.xlu0 %1483
    %1485 = vrot.lane.b32.xlu0 %v699, 64
    %v1486 = vpop.permute.xlu0 %1485
    %1487 = vrot.lane.b32.xlu0 %v700, 64
    %v1488 = vpop.permute.xlu0 %1487
    %1489 = vrot.lane.b32.xlu0 %v701, 64
    %v1490 = vpop.permute.xlu0 %1489
    %1491 = vrot.lane.b32.xlu0 %v702, 64
    %v1492 = vpop.permute.xlu0 %1491
    %1493 = vrot.lane.b32.xlu0 %v703, 64
    %v1494 = vpop.permute.xlu0 %1493
    %1495 = vrot.lane.b32.xlu0 %v704, 64
    %v1496 = vpop.permute.xlu0 %1495
    %1497 = vrot.lane.b32.xlu0 %v705, 64
    %v1498 = vpop.permute.xlu0 %1497
    %1499 = vrot.lane.b32.xlu0 %v706, 64
    %v1500 = vpop.permute.xlu0 %1499
    %1501 = vrot.lane.b32.xlu0 %v707, 64
    %v1502 = vpop.permute.xlu0 %1501
    %1503 = vrot.lane.b32.xlu0 %v708, 64
    %v1504 = vpop.permute.xlu0 %1503
    %1505 = vrot.lane.b32.xlu0 %v709, 64
    %v1506 = vpop.permute.xlu0 %1505
    %1507 = vrot.lane.b32.xlu0 %v710, 64
    %v1508 = vpop.permute.xlu0 %1507
    %1509 = vrot.lane.b32.xlu0 %v711, 64
    %v1510 = vpop.permute.xlu0 %1509
    %1511 = vrot.lane.b32.xlu0 %v712, 64
    %v1512 = vpop.permute.xlu0 %1511
    %v1545 = vsel %vm57, %v1450, 0.0
    %1546 = vadd.xlane.f32.xlu0 %v1545
    %v1547 = vpop.xlane.xlu0 %1546
    %v1548 = vsel %vm57, %v1452, 0.0
    %1549 = vadd.xlane.f32.xlu0 %v1548
    %v1550 = vpop.xlane.xlu0 %1549
    %v1551 = vsel %vm57, %v1454, 0.0
    %1552 = vadd.xlane.f32.xlu0 %v1551
    %v1553 = vpop.xlane.xlu0 %1552
    %v1554 = vsel %vm57, %v1456, 0.0
    %1555 = vadd.xlane.f32.xlu0 %v1554
    %v1556 = vpop.xlane.xlu0 %1555
    %v1557 = vsel %vm57, %v1458, 0.0
    %1558 = vadd.xlane.f32.xlu0 %v1557
    %v1559 = vpop.xlane.xlu0 %1558
    %v1560 = vsel %vm57, %v1460, 0.0
    %1561 = vadd.xlane.f32.xlu0 %v1560
    %v1562 = vpop.xlane.xlu0 %1561
    %v1563 = vsel %vm57, %v1462, 0.0
    %1564 = vadd.xlane.f32.xlu0 %v1563
    %v1565 = vpop.xlane.xlu0 %1564
    %v1566 = vsel %vm57, %v1464, 0.0
    %1567 = vadd.xlane.f32.xlu0 %v1566
    %v1568 = vpop.xlane.xlu0 %1567
    %v1569 = vsel %vm57, %v1466, 0.0
    %1570 = vadd.xlane.f32.xlu0 %v1569
    %v1571 = vpop.xlane.xlu0 %1570
    %v1572 = vsel %vm57, %v1468, 0.0
    %1573 = vadd.xlane.f32.xlu0 %v1572
    %v1574 = vpop.xlane.xlu0 %1573
    %v1575 = vsel %vm57, %v1470, 0.0
    %1576 = vadd.xlane.f32.xlu0 %v1575
    %v1577 = vpop.xlane.xlu0 %1576
    %v1578 = vsel %vm57, %v1472, 0.0
    %1579 = vadd.xlane.f32.xlu0 %v1578
    %v1580 = vpop.xlane.xlu0 %1579
    %v1581 = vsel %vm57, %v1474, 0.0
    %1582 = vadd.xlane.f32.xlu0 %v1581
    %v1583 = vpop.xlane.xlu0 %1582
    %v1584 = vsel %vm57, %v1476, 0.0
    %1585 = vadd.xlane.f32.xlu0 %v1584
    %v1586 = vpop.xlane.xlu0 %1585
    %v1587 = vsel %vm57, %v1478, 0.0
    %1588 = vadd.xlane.f32.xlu0 %v1587
    %v1589 = vpop.xlane.xlu0 %1588
    %v1590 = vsel %vm57, %v1480, 0.0
    %1591 = vadd.xlane.f32.xlu0 %v1590
    %v1592 = vpop.xlane.xlu0 %1591
    %v1593 = vsel %vm57, %v1482, 0.0
    %1594 = vadd.xlane.f32.xlu0 %v1593
    %v1595 = vpop.xlane.xlu0 %1594
    %v1596 = vsel %vm57, %v1484, 0.0
    %1597 = vadd.xlane.f32.xlu0 %v1596
    %v1598 = vpop.xlane.xlu0 %1597
    %v1599 = vsel %vm57, %v1486, 0.0
    %1600 = vadd.xlane.f32.xlu0 %v1599
    %v1601 = vpop.xlane.xlu0 %1600
    %v1602 = vsel %vm57, %v1488, 0.0
    %1603 = vadd.xlane.f32.xlu0 %v1602
    %v1604 = vpop.xlane.xlu0 %1603
    %v1605 = vsel %vm57, %v1490, 0.0
    %1606 = vadd.xlane.f32.xlu0 %v1605
    %v1607 = vpop.xlane.xlu0 %1606
    %v1608 = vsel %vm57, %v1492, 0.0
    %1609 = vadd.xlane.f32.xlu0 %v1608
    %v1610 = vpop.xlane.xlu0 %1609
    %v1611 = vsel %vm57, %v1494, 0.0
    %1612 = vadd.xlane.f32.xlu0 %v1611
    %v1613 = vpop.xlane.xlu0 %1612
    %v1614 = vsel %vm57, %v1496, 0.0
    %1615 = vadd.xlane.f32.xlu0 %v1614
    %v1616 = vpop.xlane.xlu0 %1615
    %v1617 = vsel %vm57, %v1498, 0.0
    %1618 = vadd.xlane.f32.xlu0 %v1617
    %v1619 = vpop.xlane.xlu0 %1618
    %v1620 = vsel %vm57, %v1500, 0.0
    %1621 = vadd.xlane.f32.xlu0 %v1620
    %v1622 = vpop.xlane.xlu0 %1621
    %v1623 = vsel %vm57, %v1502, 0.0
    %1624 = vadd.xlane.f32.xlu0 %v1623
    %v1625 = vpop.xlane.xlu0 %1624
    %v1626 = vsel %vm57, %v1504, 0.0
    %1627 = vadd.xlane.f32.xlu0 %v1626
    %v1628 = vpop.xlane.xlu0 %1627
    %v1629 = vsel %vm57, %v1506, 0.0
    %1630 = vadd.xlane.f32.xlu0 %v1629
    %v1631 = vpop.xlane.xlu0 %1630
    %v1632 = vsel %vm57, %v1508, 0.0
    %1633 = vadd.xlane.f32.xlu0 %v1632
    %v1634 = vpop.xlane.xlu0 %1633
    %v1635 = vsel %vm57, %v1510, 0.0
    %1636 = vadd.xlane.f32.xlu0 %v1635
    %v1637 = vpop.xlane.xlu0 %1636
    %v1638 = vsel %vm57, %v1512, 0.0
    %1639 = vadd.xlane.f32.xlu0 %v1638
    %v1640 = vpop.xlane.xlu0 %1639
    %1641 = vrot.lane.b32.xlu0 %v547, 32
    %v1642 = vpop.permute.xlu0 %1641
    %1643 = vrot.lane.b32.xlu0 %v548, 32
    %v1644 = vpop.permute.xlu0 %1643
    %1645 = vrot.lane.b32.xlu0 %v549, 32
    %v1646 = vpop.permute.xlu0 %1645
    %1647 = vrot.lane.b32.xlu0 %v550, 32
    %v1648 = vpop.permute.xlu0 %1647
    %1649 = vrot.lane.b32.xlu0 %v551, 32
    %v1650 = vpop.permute.xlu0 %1649
    %1651 = vrot.lane.b32.xlu0 %v552, 32
    %v1652 = vpop.permute.xlu0 %1651
    %1653 = vrot.lane.b32.xlu0 %v553, 32
    %v1654 = vpop.permute.xlu0 %1653
    %1655 = vrot.lane.b32.xlu0 %v554, 32
    %v1656 = vpop.permute.xlu0 %1655
    %1657 = vrot.lane.b32.xlu0 %v555, 32
    %v1658 = vpop.permute.xlu0 %1657
    %1659 = vrot.lane.b32.xlu0 %v556, 32
    %v1660 = vpop.permute.xlu0 %1659
    %1661 = vrot.lane.b32.xlu0 %v557, 32
    %v1662 = vpop.permute.xlu0 %1661
    %1663 = vrot.lane.b32.xlu0 %v558, 32
    %v1664 = vpop.permute.xlu0 %1663
    %1665 = vrot.lane.b32.xlu0 %v559, 32
    %v1666 = vpop.permute.xlu0 %1665
    %1667 = vrot.lane.b32.xlu0 %v560, 32
    %v1668 = vpop.permute.xlu0 %1667
    %1669 = vrot.lane.b32.xlu0 %v561, 32
    %v1670 = vpop.permute.xlu0 %1669
    %1671 = vrot.lane.b32.xlu0 %v562, 32
    %v1672 = vpop.permute.xlu0 %1671
    %1673 = vrot.lane.b32.xlu0 %v563, 32
    %v1674 = vpop.permute.xlu0 %1673
    %1675 = vrot.lane.b32.xlu0 %v564, 32
    %v1676 = vpop.permute.xlu0 %1675
    %1677 = vrot.lane.b32.xlu0 %v565, 32
    %v1678 = vpop.permute.xlu0 %1677
    %1679 = vrot.lane.b32.xlu0 %v566, 32
    %v1680 = vpop.permute.xlu0 %1679
    %1681 = vrot.lane.b32.xlu0 %v567, 32
    %v1682 = vpop.permute.xlu0 %1681
    %1683 = vrot.lane.b32.xlu0 %v568, 32
    %v1684 = vpop.permute.xlu0 %1683
    %1685 = vrot.lane.b32.xlu0 %v569, 32
    %v1686 = vpop.permute.xlu0 %1685
    %1687 = vrot.lane.b32.xlu0 %v570, 32
    %v1688 = vpop.permute.xlu0 %1687
    %1689 = vrot.lane.b32.xlu0 %v571, 32
    %v1690 = vpop.permute.xlu0 %1689
    %1691 = vrot.lane.b32.xlu0 %v572, 32
    %v1692 = vpop.permute.xlu0 %1691
    %1693 = vrot.lane.b32.xlu0 %v573, 32
    %v1694 = vpop.permute.xlu0 %1693
    %1695 = vrot.lane.b32.xlu0 %v574, 32
    %v1696 = vpop.permute.xlu0 %1695
    %1697 = vrot.lane.b32.xlu0 %v575, 32
    %v1698 = vpop.permute.xlu0 %1697
    %1699 = vrot.lane.b32.xlu0 %v576, 32
    %v1700 = vpop.permute.xlu0 %1699
    %1701 = vrot.lane.b32.xlu0 %v577, 32
    %v1702 = vpop.permute.xlu0 %1701
    %1703 = vrot.lane.b32.xlu0 %v578, 32
    %v1704 = vpop.permute.xlu0 %1703
    %v1737 = vsel %vm57, %v1642, 0.0
    %1738 = vadd.xlane.f32.xlu0 %v1737
    %v1739 = vpop.xlane.xlu0 %1738
    %v1740 = vsel %vm57, %v1644, 0.0
    %1741 = vadd.xlane.f32.xlu0 %v1740
    %v1742 = vpop.xlane.xlu0 %1741
    %v1743 = vsel %vm57, %v1646, 0.0
    %1744 = vadd.xlane.f32.xlu0 %v1743
    %v1745 = vpop.xlane.xlu0 %1744
    %v1746 = vsel %vm57, %v1648, 0.0
    %1747 = vadd.xlane.f32.xlu0 %v1746
    %v1748 = vpop.xlane.xlu0 %1747
    %v1749 = vsel %vm57, %v1650, 0.0
    %1750 = vadd.xlane.f32.xlu0 %v1749
    %v1751 = vpop.xlane.xlu0 %1750
    %v1752 = vsel %vm57, %v1652, 0.0
    %1753 = vadd.xlane.f32.xlu0 %v1752
    %v1754 = vpop.xlane.xlu0 %1753
    %v1755 = vsel %vm57, %v1654, 0.0
    %1756 = vadd.xlane.f32.xlu0 %v1755
    %v1757 = vpop.xlane.xlu0 %1756
    %v1758 = vsel %vm57, %v1656, 0.0
    %1759 = vadd.xlane.f32.xlu0 %v1758
    %v1760 = vpop.xlane.xlu0 %1759
    %v1761 = vsel %vm57, %v1658, 0.0
    %1762 = vadd.xlane.f32.xlu0 %v1761
    %v1763 = vpop.xlane.xlu0 %1762
    %v1764 = vsel %vm57, %v1660, 0.0
    %1765 = vadd.xlane.f32.xlu0 %v1764
    %v1766 = vpop.xlane.xlu0 %1765
    %v1767 = vsel %vm57, %v1662, 0.0
    %1768 = vadd.xlane.f32.xlu0 %v1767
    %v1769 = vpop.xlane.xlu0 %1768
    %v1770 = vsel %vm57, %v1664, 0.0
    %1771 = vadd.xlane.f32.xlu0 %v1770
    %v1772 = vpop.xlane.xlu0 %1771
    %v1773 = vsel %vm57, %v1666, 0.0
    %1774 = vadd.xlane.f32.xlu0 %v1773
    %v1775 = vpop.xlane.xlu0 %1774
    %v1776 = vsel %vm57, %v1668, 0.0
    %1777 = vadd.xlane.f32.xlu0 %v1776
    %v1778 = vpop.xlane.xlu0 %1777
    %v1779 = vsel %vm57, %v1670, 0.0
    %1780 = vadd.xlane.f32.xlu0 %v1779
    %v1781 = vpop.xlane.xlu0 %1780
    %v1782 = vsel %vm57, %v1672, 0.0
    %1783 = vadd.xlane.f32.xlu0 %v1782
    %v1784 = vpop.xlane.xlu0 %1783
    %v1785 = vsel %vm57, %v1674, 0.0
    %1786 = vadd.xlane.f32.xlu0 %v1785
    %v1787 = vpop.xlane.xlu0 %1786
    %v1788 = vsel %vm57, %v1676, 0.0
    %1789 = vadd.xlane.f32.xlu0 %v1788
    %v1790 = vpop.xlane.xlu0 %1789
    %v1791 = vsel %vm57, %v1678, 0.0
    %1792 = vadd.xlane.f32.xlu0 %v1791
    %v1793 = vpop.xlane.xlu0 %1792
    %v1794 = vsel %vm57, %v1680, 0.0
    %1795 = vadd.xlane.f32.xlu0 %v1794
    %v1796 = vpop.xlane.xlu0 %1795
    %v1797 = vsel %vm57, %v1682, 0.0
    %1798 = vadd.xlane.f32.xlu0 %v1797
    %v1799 = vpop.xlane.xlu0 %1798
    %v1800 = vsel %vm57, %v1684, 0.0
    %1801 = vadd.xlane.f32.xlu0 %v1800
    %v1802 = vpop.xlane.xlu0 %1801
    %v1803 = vsel %vm57, %v1686, 0.0
    %1804 = vadd.xlane.f32.xlu0 %v1803
    %v1805 = vpop.xlane.xlu0 %1804
    %v1806 = vsel %vm57, %v1688, 0.0
    %1807 = vadd.xlane.f32.xlu0 %v1806
    %v1808 = vpop.xlane.xlu0 %1807
    %v1809 = vsel %vm57, %v1690, 0.0
    %1810 = vadd.xlane.f32.xlu0 %v1809
    %v1811 = vpop.xlane.xlu0 %1810
    %v1812 = vsel %vm57, %v1692, 0.0
    %1813 = vadd.xlane.f32.xlu0 %v1812
    %v1814 = vpop.xlane.xlu0 %1813
    %v1815 = vsel %vm57, %v1694, 0.0
    %1816 = vadd.xlane.f32.xlu0 %v1815
    %v1817 = vpop.xlane.xlu0 %1816
    %v1818 = vsel %vm57, %v1696, 0.0
    %1819 = vadd.xlane.f32.xlu0 %v1818
    %v1820 = vpop.xlane.xlu0 %1819
    %v1821 = vsel %vm57, %v1698, 0.0
    %1822 = vadd.xlane.f32.xlu0 %v1821
    %v1823 = vpop.xlane.xlu0 %1822
    %v1824 = vsel %vm57, %v1700, 0.0
    %1825 = vadd.xlane.f32.xlu0 %v1824
    %v1826 = vpop.xlane.xlu0 %1825
    %v1827 = vsel %vm57, %v1702, 0.0
    %1828 = vadd.xlane.f32.xlu0 %v1827
    %v1829 = vpop.xlane.xlu0 %1828
    %v1830 = vsel %vm57, %v1704, 0.0
    %1831 = vadd.xlane.f32.xlu0 %v1830
    %v1832 = vpop.xlane.xlu0 %1831
    %1833 = vrot.lane.b32.xlu0 %v681, 32
    %v1834 = vpop.permute.xlu0 %1833
    %1835 = vrot.lane.b32.xlu0 %v682, 32
    %v1836 = vpop.permute.xlu0 %1835
    %1837 = vrot.lane.b32.xlu0 %v683, 32
    %v1838 = vpop.permute.xlu0 %1837
    %1839 = vrot.lane.b32.xlu0 %v684, 32
    %v1840 = vpop.permute.xlu0 %1839
    %1841 = vrot.lane.b32.xlu0 %v685, 32
    %v1842 = vpop.permute.xlu0 %1841
    %1843 = vrot.lane.b32.xlu0 %v686, 32
    %v1844 = vpop.permute.xlu0 %1843
    %1845 = vrot.lane.b32.xlu0 %v687, 32
    %v1846 = vpop.permute.xlu0 %1845
    %1847 = vrot.lane.b32.xlu0 %v688, 32
    %v1848 = vpop.permute.xlu0 %1847
    %1849 = vrot.lane.b32.xlu0 %v689, 32
    %v1850 = vpop.permute.xlu0 %1849
    %1851 = vrot.lane.b32.xlu0 %v690, 32
    %v1852 = vpop.permute.xlu0 %1851
    %1853 = vrot.lane.b32.xlu0 %v691, 32
    %v1854 = vpop.permute.xlu0 %1853
    %1855 = vrot.lane.b32.xlu0 %v692, 32
    %v1856 = vpop.permute.xlu0 %1855
    %1857 = vrot.lane.b32.xlu0 %v693, 32
    %v1858 = vpop.permute.xlu0 %1857
    %1859 = vrot.lane.b32.xlu0 %v694, 32
    %v1860 = vpop.permute.xlu0 %1859
    %1861 = vrot.lane.b32.xlu0 %v695, 32
    %v1862 = vpop.permute.xlu0 %1861
    %1863 = vrot.lane.b32.xlu0 %v696, 32
    %v1864 = vpop.permute.xlu0 %1863
    %1865 = vrot.lane.b32.xlu0 %v697, 32
    %v1866 = vpop.permute.xlu0 %1865
    %1867 = vrot.lane.b32.xlu0 %v698, 32
    %v1868 = vpop.permute.xlu0 %1867
    %1869 = vrot.lane.b32.xlu0 %v699, 32
    %v1870 = vpop.permute.xlu0 %1869
    %1871 = vrot.lane.b32.xlu0 %v700, 32
    %v1872 = vpop.permute.xlu0 %1871
    %1873 = vrot.lane.b32.xlu0 %v701, 32
    %v1874 = vpop.permute.xlu0 %1873
    %1875 = vrot.lane.b32.xlu0 %v702, 32
    %v1876 = vpop.permute.xlu0 %1875
    %1877 = vrot.lane.b32.xlu0 %v703, 32
    %v1878 = vpop.permute.xlu0 %1877
    %1879 = vrot.lane.b32.xlu0 %v704, 32
    %v1880 = vpop.permute.xlu0 %1879
    %1881 = vrot.lane.b32.xlu0 %v705, 32
    %v1882 = vpop.permute.xlu0 %1881
    %1883 = vrot.lane.b32.xlu0 %v706, 32
    %v1884 = vpop.permute.xlu0 %1883
    %1885 = vrot.lane.b32.xlu0 %v707, 32
    %v1886 = vpop.permute.xlu0 %1885
    %1887 = vrot.lane.b32.xlu0 %v708, 32
    %v1888 = vpop.permute.xlu0 %1887
    %1889 = vrot.lane.b32.xlu0 %v709, 32
    %v1890 = vpop.permute.xlu0 %1889
    %1891 = vrot.lane.b32.xlu0 %v710, 32
    %v1892 = vpop.permute.xlu0 %1891
    %1893 = vrot.lane.b32.xlu0 %v711, 32
    %v1894 = vpop.permute.xlu0 %1893
    %1895 = vrot.lane.b32.xlu0 %v712, 32
    %v1896 = vpop.permute.xlu0 %1895
    %v1929 = vsel %vm57, %v1834, 0.0
    %1930 = vadd.xlane.f32.xlu0 %v1929
    %v1931 = vpop.xlane.xlu0 %1930
    %v1932 = vsel %vm57, %v1836, 0.0
    %1933 = vadd.xlane.f32.xlu0 %v1932
    %v1934 = vpop.xlane.xlu0 %1933
    %v1935 = vsel %vm57, %v1838, 0.0
    %1936 = vadd.xlane.f32.xlu0 %v1935
    %v1937 = vpop.xlane.xlu0 %1936
    %v1938 = vsel %vm57, %v1840, 0.0
    %1939 = vadd.xlane.f32.xlu0 %v1938
    %v1940 = vpop.xlane.xlu0 %1939
    %v1941 = vsel %vm57, %v1842, 0.0
    %1942 = vadd.xlane.f32.xlu0 %v1941
    %v1943 = vpop.xlane.xlu0 %1942
    %v1944 = vsel %vm57, %v1844, 0.0
    %1945 = vadd.xlane.f32.xlu0 %v1944
    %v1946 = vpop.xlane.xlu0 %1945
    %v1947 = vsel %vm57, %v1846, 0.0
    %1948 = vadd.xlane.f32.xlu0 %v1947
    %v1949 = vpop.xlane.xlu0 %1948
    %v1950 = vsel %vm57, %v1848, 0.0
    %1951 = vadd.xlane.f32.xlu0 %v1950
    %v1952 = vpop.xlane.xlu0 %1951
    %v1953 = vsel %vm57, %v1850, 0.0
    %1954 = vadd.xlane.f32.xlu0 %v1953
    %v1955 = vpop.xlane.xlu0 %1954
    %v1956 = vsel %vm57, %v1852, 0.0
    %1957 = vadd.xlane.f32.xlu0 %v1956
    %v1958 = vpop.xlane.xlu0 %1957
    %v1959 = vsel %vm57, %v1854, 0.0
    %1960 = vadd.xlane.f32.xlu0 %v1959
    %v1961 = vpop.xlane.xlu0 %1960
    %v1962 = vsel %vm57, %v1856, 0.0
    %1963 = vadd.xlane.f32.xlu0 %v1962
    %v1964 = vpop.xlane.xlu0 %1963
    %v1965 = vsel %vm57, %v1858, 0.0
    %1966 = vadd.xlane.f32.xlu0 %v1965
    %v1967 = vpop.xlane.xlu0 %1966
    %v1968 = vsel %vm57, %v1860, 0.0
    %1969 = vadd.xlane.f32.xlu0 %v1968
    %v1970 = vpop.xlane.xlu0 %1969
    %v1971 = vsel %vm57, %v1862, 0.0
    %1972 = vadd.xlane.f32.xlu0 %v1971
    %v1973 = vpop.xlane.xlu0 %1972
    %v1974 = vsel %vm57, %v1864, 0.0
    %1975 = vadd.xlane.f32.xlu0 %v1974
    %v1976 = vpop.xlane.xlu0 %1975
    %v1977 = vsel %vm57, %v1866, 0.0
    %1978 = vadd.xlane.f32.xlu0 %v1977
    %v1979 = vpop.xlane.xlu0 %1978
    %v1980 = vsel %vm57, %v1868, 0.0
    %1981 = vadd.xlane.f32.xlu0 %v1980
    %v1982 = vpop.xlane.xlu0 %1981
    %v1983 = vsel %vm57, %v1870, 0.0
    %1984 = vadd.xlane.f32.xlu0 %v1983
    %v1985 = vpop.xlane.xlu0 %1984
    %v1986 = vsel %vm57, %v1872, 0.0
    %1987 = vadd.xlane.f32.xlu0 %v1986
    %v1988 = vpop.xlane.xlu0 %1987
    %v1989 = vsel %vm57, %v1874, 0.0
    %1990 = vadd.xlane.f32.xlu0 %v1989
    %v1991 = vpop.xlane.xlu0 %1990
    %v1992 = vsel %vm57, %v1876, 0.0
    %1993 = vadd.xlane.f32.xlu0 %v1992
    %v1994 = vpop.xlane.xlu0 %1993
    %v1995 = vsel %vm57, %v1878, 0.0
    %1996 = vadd.xlane.f32.xlu0 %v1995
    %v1997 = vpop.xlane.xlu0 %1996
    %v1998 = vsel %vm57, %v1880, 0.0
    %1999 = vadd.xlane.f32.xlu0 %v1998
    %v2000 = vpop.xlane.xlu0 %1999
    %v2001 = vsel %vm57, %v1882, 0.0
    %2002 = vadd.xlane.f32.xlu0 %v2001
    %v2003 = vpop.xlane.xlu0 %2002
    %v2004 = vsel %vm57, %v1884, 0.0
    %2005 = vadd.xlane.f32.xlu0 %v2004
    %v2006 = vpop.xlane.xlu0 %2005
    %v2007 = vsel %vm57, %v1886, 0.0
    %2008 = vadd.xlane.f32.xlu0 %v2007
    %v2009 = vpop.xlane.xlu0 %2008
    %v2010 = vsel %vm57, %v1888, 0.0
    %2011 = vadd.xlane.f32.xlu0 %v2010
    %v2012 = vpop.xlane.xlu0 %2011
    %v2013 = vsel %vm57, %v1890, 0.0
    %2014 = vadd.xlane.f32.xlu0 %v2013
    %v2015 = vpop.xlane.xlu0 %2014
    %v2016 = vsel %vm57, %v1892, 0.0
    %2017 = vadd.xlane.f32.xlu0 %v2016
    %v2018 = vpop.xlane.xlu0 %2017
    %v2019 = vsel %vm57, %v1894, 0.0
    %2020 = vadd.xlane.f32.xlu0 %v2019
    %v2021 = vpop.xlane.xlu0 %2020
    %v2022 = vsel %vm57, %v1896, 0.0
    %2023 = vadd.xlane.f32.xlu0 %v2022
    %v2024 = vpop.xlane.xlu0 %2023
    %vm2025 = vcmask 7168
    %v2026 = vsel %vm2025, %v581, %v939
    %v2027 = vsel %vm2025, %v584, %v942
    %v2028 = vsel %vm2025, %v587, %v945
    %v2029 = vsel %vm2025, %v590, %v948
    %v2030 = vsel %vm2025, %v593, %v951
    %v2031 = vsel %vm2025, %v596, %v954
    %v2032 = vsel %vm2025, %v599, %v957
    %v2033 = vsel %vm2025, %v602, %v960
    %v2034 = vsel %vm2025, %v605, %v963
    %v2035 = vsel %vm2025, %v608, %v966
    %v2036 = vsel %vm2025, %v611, %v969
    %v2037 = vsel %vm2025, %v614, %v972
    %v2038 = vsel %vm2025, %v617, %v975
    %v2039 = vsel %vm2025, %v620, %v978
    %v2040 = vsel %vm2025, %v623, %v981
    %v2041 = vsel %vm2025, %v626, %v984
    %v2042 = vsel %vm2025, %v629, %v987
    %v2043 = vsel %vm2025, %v632, %v990
    %v2044 = vsel %vm2025, %v635, %v993
    %v2045 = vsel %vm2025, %v638, %v996
    %v2046 = vsel %vm2025, %v641, %v999
    %v2047 = vsel %vm2025, %v644, %v1002
    %v2048 = vsel %vm2025, %v647, %v1005
    %v2049 = vsel %vm2025, %v650, %v1008
    %v2050 = vsel %vm2025, %v653, %v1011
    %v2051 = vsel %vm2025, %v656, %v1014
    %v2052 = vsel %vm2025, %v659, %v1017
    %v2053 = vsel %vm2025, %v662, %v1020
    %v2054 = vsel %vm2025, %v665, %v1023
    %v2055 = vsel %vm2025, %v668, %v1026
    %v2056 = vsel %vm2025, %v671, %v1029
    %v2057 = vsel %vm2025, %v674, %v1032
    %vm2058 = vcmask 15360
    %v2059 = vsel %vm2058, %v2026, %v1355
    %v2060 = vsel %vm2058, %v2027, %v1358
    %v2061 = vsel %vm2058, %v2028, %v1361
    %v2062 = vsel %vm2058, %v2029, %v1364
    %v2063 = vsel %vm2058, %v2030, %v1367
    %v2064 = vsel %vm2058, %v2031, %v1370
    %v2065 = vsel %vm2058, %v2032, %v1373
    %v2066 = vsel %vm2058, %v2033, %v1376
    %v2067 = vsel %vm2058, %v2034, %v1379
    %v2068 = vsel %vm2058, %v2035, %v1382
    %v2069 = vsel %vm2058, %v2036, %v1385
    %v2070 = vsel %vm2058, %v2037, %v1388
    %v2071 = vsel %vm2058, %v2038, %v1391
    %v2072 = vsel %vm2058, %v2039, %v1394
    %v2073 = vsel %vm2058, %v2040, %v1397
    %v2074 = vsel %vm2058, %v2041, %v1400
    %v2075 = vsel %vm2058, %v2042, %v1403
    %v2076 = vsel %vm2058, %v2043, %v1406
    %v2077 = vsel %vm2058, %v2044, %v1409
    %v2078 = vsel %vm2058, %v2045, %v1412
    %v2079 = vsel %vm2058, %v2046, %v1415
    %v2080 = vsel %vm2058, %v2047, %v1418
    %v2081 = vsel %vm2058, %v2048, %v1421
    %v2082 = vsel %vm2058, %v2049, %v1424
    %v2083 = vsel %vm2058, %v2050, %v1427
    %v2084 = vsel %vm2058, %v2051, %v1430
    %v2085 = vsel %vm2058, %v2052, %v1433
    %v2086 = vsel %vm2058, %v2053, %v1436
    %v2087 = vsel %vm2058, %v2054, %v1439
    %v2088 = vsel %vm2058, %v2055, %v1442
    %v2089 = vsel %vm2058, %v2056, %v1445
    %v2090 = vsel %vm2058, %v2057, %v1448
    %vm2091 = vcmask 23552
    %v2092 = vsel %vm2091, %v2059, %v1739
    %v2093 = vsel %vm2091, %v2060, %v1742
    %v2094 = vsel %vm2091, %v2061, %v1745
    %v2095 = vsel %vm2091, %v2062, %v1748
    %v2096 = vsel %vm2091, %v2063, %v1751
    %v2097 = vsel %vm2091, %v2064, %v1754
    %v2098 = vsel %vm2091, %v2065, %v1757
    %v2099 = vsel %vm2091, %v2066, %v1760
    %v2100 = vsel %vm2091, %v2067, %v1763
    %v2101 = vsel %vm2091, %v2068, %v1766
    %v2102 = vsel %vm2091, %v2069, %v1769
    %v2103 = vsel %vm2091, %v2070, %v1772
    %v2104 = vsel %vm2091, %v2071, %v1775
    %v2105 = vsel %vm2091, %v2072, %v1778
    %v2106 = vsel %vm2091, %v2073, %v1781
    %v2107 = vsel %vm2091, %v2074, %v1784
    %v2108 = vsel %vm2091, %v2075, %v1787
    %v2109 = vsel %vm2091, %v2076, %v1790
    %v2110 = vsel %vm2091, %v2077, %v1793
    %v2111 = vsel %vm2091, %v2078, %v1796
    %v2112 = vsel %vm2091, %v2079, %v1799
    %v2113 = vsel %vm2091, %v2080, %v1802
    %v2114 = vsel %vm2091, %v2081, %v1805
    %v2115 = vsel %vm2091, %v2082, %v1808
    %v2116 = vsel %vm2091, %v2083, %v1811
    %v2117 = vsel %vm2091, %v2084, %v1814
    %v2118 = vsel %vm2091, %v2085, %v1817
    %v2119 = vsel %vm2091, %v2086, %v1820
    %v2120 = vsel %vm2091, %v2087, %v1823
    %v2121 = vsel %vm2091, %v2088, %v1826
    %v2122 = vsel %vm2091, %v2089, %v1829
    %v2123 = vsel %vm2091, %v2090, %v1832
    %vm2124 = vcmask 31744
    %2125 = vst.msk [vmem:[%s5] sm:$0xff] %vm2124, %v2092
    %2126 = vst.msk [vmem:[%s5 + $0x8] sm:$0xff] %vm2124, %v2093
    %2127 = vst.msk [vmem:[%s5 + $0x10] sm:$0xff] %vm2124, %v2094
    %2128 = vst.msk [vmem:[%s5 + $0x18] sm:$0xff] %vm2124, %v2095
    %2129 = vst.msk [vmem:[%s5 + $0x20] sm:$0xff] %vm2124, %v2096
    %2130 = vst.msk [vmem:[%s5 + $0x28] sm:$0xff] %vm2124, %v2097
    %2131 = vst.msk [vmem:[%s5 + $0x30] sm:$0xff] %vm2124, %v2098
    %2132 = vst.msk [vmem:[%s5 + $0x38] sm:$0xff] %vm2124, %v2099
    %2133 = vst.msk [vmem:[%s5 + $0x40] sm:$0xff] %vm2124, %v2100
    %2134 = vst.msk [vmem:[%s5 + $0x48] sm:$0xff] %vm2124, %v2101
    %2135 = vst.msk [vmem:[%s5 + $0x50] sm:$0xff] %vm2124, %v2102
    %2136 = vst.msk [vmem:[%s5 + $0x58] sm:$0xff] %vm2124, %v2103
    %2137 = vst.msk [vmem:[%s5 + $0x60] sm:$0xff] %vm2124, %v2104
    %2138 = vst.msk [vmem:[%s5 + $0x68] sm:$0xff] %vm2124, %v2105
    %2139 = vst.msk [vmem:[%s5 + $0x70] sm:$0xff] %vm2124, %v2106
    %2140 = vst.msk [vmem:[%s5 + $0x78] sm:$0xff] %vm2124, %v2107
    %2141 = vst.msk [vmem:[%s5 + $0x80] sm:$0xff] %vm2124, %v2108
    %2142 = vst.msk [vmem:[%s5 + $0x88] sm:$0xff] %vm2124, %v2109
    %2143 = vst.msk [vmem:[%s5 + $0x90] sm:$0xff] %vm2124, %v2110
    %2144 = vst.msk [vmem:[%s5 + $0x98] sm:$0xff] %vm2124, %v2111
    %2145 = vst.msk [vmem:[%s5 + $0xa0] sm:$0xff] %vm2124, %v2112
    %2146 = vst.msk [vmem:[%s5 + $0xa8] sm:$0xff] %vm2124, %v2113
    %2147 = vst.msk [vmem:[%s5 + $0xb0] sm:$0xff] %vm2124, %v2114
    %2148 = vst.msk [vmem:[%s5 + $0xb8] sm:$0xff] %vm2124, %v2115
    %2149 = vst.msk [vmem:[%s5 + $0xc0] sm:$0xff] %vm2124, %v2116
    %2150 = vst.msk [vmem:[%s5 + $0xc8] sm:$0xff] %vm2124, %v2117
    %2151 = vst.msk [vmem:[%s5 + $0xd0] sm:$0xff] %vm2124, %v2118
    %2152 = vst.msk [vmem:[%s5 + $0xd8] sm:$0xff] %vm2124, %v2119
    %2153 = vst.msk [vmem:[%s5 + $0xe0] sm:$0xff] %vm2124, %v2120
    %2154 = vst.msk [vmem:[%s5 + $0xe8] sm:$0xff] %vm2124, %v2121
    %2155 = vst.msk [vmem:[%s5 + $0xf0] sm:$0xff] %vm2124, %v2122
    %2156 = vst.msk [vmem:[%s5 + $0xf8] sm:$0xff] %vm2124, %v2123
    %v2157 = vsel %vm2025, %v715, %v1163
    %v2158 = vsel %vm2025, %v718, %v1166
    %v2159 = vsel %vm2025, %v721, %v1169
    %v2160 = vsel %vm2025, %v724, %v1172
    %v2161 = vsel %vm2025, %v727, %v1175
    %v2162 = vsel %vm2025, %v730, %v1178
    %v2163 = vsel %vm2025, %v733, %v1181
    %v2164 = vsel %vm2025, %v736, %v1184
    %v2165 = vsel %vm2025, %v739, %v1187
    %v2166 = vsel %vm2025, %v742, %v1190
    %v2167 = vsel %vm2025, %v745, %v1193
    %v2168 = vsel %vm2025, %v748, %v1196
    %v2169 = vsel %vm2025, %v751, %v1199
    %v2170 = vsel %vm2025, %v754, %v1202
    %v2171 = vsel %vm2025, %v757, %v1205
    %v2172 = vsel %vm2025, %v760, %v1208
    %v2173 = vsel %vm2025, %v763, %v1211
    %v2174 = vsel %vm2025, %v766, %v1214
    %v2175 = vsel %vm2025, %v769, %v1217
    %v2176 = vsel %vm2025, %v772, %v1220
    %v2177 = vsel %vm2025, %v775, %v1223
    %v2178 = vsel %vm2025, %v778, %v1226
    %v2179 = vsel %vm2025, %v781, %v1229
    %v2180 = vsel %vm2025, %v784, %v1232
    %v2181 = vsel %vm2025, %v787, %v1235
    %v2182 = vsel %vm2025, %v790, %v1238
    %v2183 = vsel %vm2025, %v793, %v1241
    %v2184 = vsel %vm2025, %v796, %v1244
    %v2185 = vsel %vm2025, %v799, %v1247
    %v2186 = vsel %vm2025, %v802, %v1250
    %v2187 = vsel %vm2025, %v805, %v1253
    %v2188 = vsel %vm2025, %v808, %v1256
    %v2189 = vsel %vm2058, %v2157, %v1547
    %v2190 = vsel %vm2058, %v2158, %v1550
    %v2191 = vsel %vm2058, %v2159, %v1553
    %v2192 = vsel %vm2058, %v2160, %v1556
    %v2193 = vsel %vm2058, %v2161, %v1559
    %v2194 = vsel %vm2058, %v2162, %v1562
    %v2195 = vsel %vm2058, %v2163, %v1565
    %v2196 = vsel %vm2058, %v2164, %v1568
    %v2197 = vsel %vm2058, %v2165, %v1571
    %v2198 = vsel %vm2058, %v2166, %v1574
    %v2199 = vsel %vm2058, %v2167, %v1577
    %v2200 = vsel %vm2058, %v2168, %v1580
    %v2201 = vsel %vm2058, %v2169, %v1583
    %v2202 = vsel %vm2058, %v2170, %v1586
    %v2203 = vsel %vm2058, %v2171, %v1589
    %v2204 = vsel %vm2058, %v2172, %v1592
    %v2205 = vsel %vm2058, %v2173, %v1595
    %v2206 = vsel %vm2058, %v2174, %v1598
    %v2207 = vsel %vm2058, %v2175, %v1601
    %v2208 = vsel %vm2058, %v2176, %v1604
    %v2209 = vsel %vm2058, %v2177, %v1607
    %v2210 = vsel %vm2058, %v2178, %v1610
    %v2211 = vsel %vm2058, %v2179, %v1613
    %v2212 = vsel %vm2058, %v2180, %v1616
    %v2213 = vsel %vm2058, %v2181, %v1619
    %v2214 = vsel %vm2058, %v2182, %v1622
    %v2215 = vsel %vm2058, %v2183, %v1625
    %v2216 = vsel %vm2058, %v2184, %v1628
    %v2217 = vsel %vm2058, %v2185, %v1631
    %v2218 = vsel %vm2058, %v2186, %v1634
    %v2219 = vsel %vm2058, %v2187, %v1637
    %v2220 = vsel %vm2058, %v2188, %v1640
    %v2221 = vsel %vm2091, %v2189, %v1931
    %v2222 = vsel %vm2091, %v2190, %v1934
    %v2223 = vsel %vm2091, %v2191, %v1937
    %v2224 = vsel %vm2091, %v2192, %v1940
    %v2225 = vsel %vm2091, %v2193, %v1943
    %v2226 = vsel %vm2091, %v2194, %v1946
    %v2227 = vsel %vm2091, %v2195, %v1949
    %v2228 = vsel %vm2091, %v2196, %v1952
    %v2229 = vsel %vm2091, %v2197, %v1955
    %v2230 = vsel %vm2091, %v2198, %v1958
    %v2231 = vsel %vm2091, %v2199, %v1961
    %v2232 = vsel %vm2091, %v2200, %v1964
    %v2233 = vsel %vm2091, %v2201, %v1967
    %v2234 = vsel %vm2091, %v2202, %v1970
    %v2235 = vsel %vm2091, %v2203, %v1973
    %v2236 = vsel %vm2091, %v2204, %v1976
    %v2237 = vsel %vm2091, %v2205, %v1979
    %v2238 = vsel %vm2091, %v2206, %v1982
    %v2239 = vsel %vm2091, %v2207, %v1985
    %v2240 = vsel %vm2091, %v2208, %v1988
    %v2241 = vsel %vm2091, %v2209, %v1991
    %v2242 = vsel %vm2091, %v2210, %v1994
    %v2243 = vsel %vm2091, %v2211, %v1997
    %v2244 = vsel %vm2091, %v2212, %v2000
    %v2245 = vsel %vm2091, %v2213, %v2003
    %v2246 = vsel %vm2091, %v2214, %v2006
    %v2247 = vsel %vm2091, %v2215, %v2009
    %v2248 = vsel %vm2091, %v2216, %v2012
    %v2249 = vsel %vm2091, %v2217, %v2015
    %v2250 = vsel %vm2091, %v2218, %v2018
    %v2251 = vsel %vm2091, %v2219, %v2021
    %v2252 = vsel %vm2091, %v2220, %v2024
    %2253 = vst.msk [vmem:[%s6] sm:$0xff] %vm2124, %v2221
    %2254 = vst.msk [vmem:[%s6 + $0x8] sm:$0xff] %vm2124, %v2222
    %2255 = vst.msk [vmem:[%s6 + $0x10] sm:$0xff] %vm2124, %v2223
    %2256 = vst.msk [vmem:[%s6 + $0x18] sm:$0xff] %vm2124, %v2224
    %2257 = vst.msk [vmem:[%s6 + $0x20] sm:$0xff] %vm2124, %v2225
    %2258 = vst.msk [vmem:[%s6 + $0x28] sm:$0xff] %vm2124, %v2226
    %2259 = vst.msk [vmem:[%s6 + $0x30] sm:$0xff] %vm2124, %v2227
    %2260 = vst.msk [vmem:[%s6 + $0x38] sm:$0xff] %vm2124, %v2228
    %2261 = vst.msk [vmem:[%s6 + $0x40] sm:$0xff] %vm2124, %v2229
    %2262 = vst.msk [vmem:[%s6 + $0x48] sm:$0xff] %vm2124, %v2230
    %2263 = vst.msk [vmem:[%s6 + $0x50] sm:$0xff] %vm2124, %v2231
    %2264 = vst.msk [vmem:[%s6 + $0x58] sm:$0xff] %vm2124, %v2232
    %2265 = vst.msk [vmem:[%s6 + $0x60] sm:$0xff] %vm2124, %v2233
    %2266 = vst.msk [vmem:[%s6 + $0x68] sm:$0xff] %vm2124, %v2234
    %2267 = vst.msk [vmem:[%s6 + $0x70] sm:$0xff] %vm2124, %v2235
    %2268 = vst.msk [vmem:[%s6 + $0x78] sm:$0xff] %vm2124, %v2236
    %2269 = vst.msk [vmem:[%s6 + $0x80] sm:$0xff] %vm2124, %v2237
    %2270 = vst.msk [vmem:[%s6 + $0x88] sm:$0xff] %vm2124, %v2238
    %2271 = vst.msk [vmem:[%s6 + $0x90] sm:$0xff] %vm2124, %v2239
    %2272 = vst.msk [vmem:[%s6 + $0x98] sm:$0xff] %vm2124, %v2240
    %2273 = vst.msk [vmem:[%s6 + $0xa0] sm:$0xff] %vm2124, %v2241
    %2274 = vst.msk [vmem:[%s6 + $0xa8] sm:$0xff] %vm2124, %v2242
    %2275 = vst.msk [vmem:[%s6 + $0xb0] sm:$0xff] %vm2124, %v2243
    %2276 = vst.msk [vmem:[%s6 + $0xb8] sm:$0xff] %vm2124, %v2244
    %2277 = vst.msk [vmem:[%s6 + $0xc0] sm:$0xff] %vm2124, %v2245
    %2278 = vst.msk [vmem:[%s6 + $0xc8] sm:$0xff] %vm2124, %v2246
    %2279 = vst.msk [vmem:[%s6 + $0xd0] sm:$0xff] %vm2124, %v2247
    %2280 = vst.msk [vmem:[%s6 + $0xd8] sm:$0xff] %vm2124, %v2248
    %2281 = vst.msk [vmem:[%s6 + $0xe0] sm:$0xff] %vm2124, %v2249
    %2282 = vst.msk [vmem:[%s6 + $0xe8] sm:$0xff] %vm2124, %v2250
    %2283 = vst.msk [vmem:[%s6 + $0xf0] sm:$0xff] %vm2124, %v2251
    %2284 = vst.msk [vmem:[%s6 + $0xf8] sm:$0xff] %vm2124, %v2252
    // Predicated region
    $region18: #{tpu_custom_call.1} parent=1 // pred_check
      _
    $region19: #{tpu_custom_call.1} parent=1 // pred_check_branch
      %2286 = sbr.rel (0) target = $region21
    $region20: #{tpu_custom_call.1} parent=1 // pred_region
      %s2288 = ssub.s32 2048, 2048
      %2289 = vsyncadd [#allocation3], %s2288
      %s2290 = sshll.u32 [#allocation2], 4
      %s2291 = int_to_ptr.vmem [resolvable:$true] %s2290
      %2296 = dma.vmem_to_hbm [thread:$0]  %s2291, 2048, %s4, [#allocation3], 64, 64, 4
    $region21: #{tpu_custom_call.1} parent=1 // pred_fallthru
      _
    // Predicated region
    $region22: #{tpu_custom_call.1} parent=1 // pred_check
      _
    $region23: #{tpu_custom_call.1} parent=1 // pred_check_branch
      %2298 = sbr.rel (0) target = $region25
    $region24: #{tpu_custom_call.1} parent=1 // pred_region
      _
    $region25: #{tpu_custom_call.1} parent=1 // pred_fallthru
      _
    // Predicated region
    $region26: #{tpu_custom_call.1} parent=1 // pred_check
      _
    $region27: #{tpu_custom_call.1} parent=1 // pred_check_branch
      %2300 = sbr.rel (0) target = $region29
    $region28: #{tpu_custom_call.1} parent=1 // pred_region
      _
    $region29: #{tpu_custom_call.1} parent=1 // pred_fallthru
      _
    // Predicated region
    $region30: #{tpu_custom_call.1} parent=1 // pred_check
      _
    $region31: #{tpu_custom_call.1} parent=1 // pred_check_branch
      %2302 = sbr.rel (0) target = $region33
    $region32: #{tpu_custom_call.1} parent=1 // pred_region
      %2303 = dma.done [#allocation3], 2048
    $region33: #{tpu_custom_call.1} parent=1 // pred_fallthru
      _
    // Predicated region
    $region34: #{tpu_custom_call.1} parent=1 // pred_check
      _
    $region35: #{tpu_custom_call.1} parent=1 // pred_check_branch
      %2305 = sbr.rel (0) target = $region37
    $region36: #{tpu_custom_call.1} parent=1 // pred_region
      _
    $region37: #{tpu_custom_call.1} parent=1 // pred_fallthru
      _
    // Predicated region
    $region38: #{tpu_custom_call.1} parent=1 // pred_check
      _
    $region39: #{tpu_custom_call.1} parent=1 // pred_check_branch
      %2307 = sbr.rel (0) target = $region41
    $region40: #{tpu_custom_call.1} parent=1 // pred_region
      _
    $region41: #{tpu_custom_call.1} parent=1 // pred_fallthru
      _
    %2308 = vsyncpa [#allocation3], 1

</llo_original>
